<compile_context>
chip_gen: v7x
topology: tpu7x:2x2x1
jax: 0.10.0
libtpu: 0.0.40
codegen_flags: <defaults>
</compile_context>

<pallas_src>
import math

import jax
import jax.numpy as jnp
import numpy as np
from jax.experimental import pallas as pl
from jax.experimental.pallas import tpu as pltpu


def _round_up(v, m):
    return ((v + m - 1) // m) * m


# ---------------------------------------------------------------------------
# Host-side parameter folding helpers (inference-mode BatchNorm).
# ---------------------------------------------------------------------------
def _fold_bn(bn, conv_bias=None, eps=1e-5):
    gamma, beta, mean, var = bn
    scale = gamma * jax.lax.rsqrt(var + eps)
    if conv_bias is None:
        bias = beta - mean * scale
    else:
        bias = beta + (conv_bias - mean) * scale
    return scale.astype(jnp.float32), bias.astype(jnp.float32)


def _tap_masks(k, H, W, hw_pad):
    """(k*k, HW_pad) f32 boundary masks for the lane-shifted kxk conv taps."""
    p = (k - 1) // 2
    hw = H * W
    idx = np.arange(hw_pad)
    row, col = idx // W, idx % W
    in_img = idx < hw
    masks = np.zeros((k * k, hw_pad), np.float32)
    for dy in range(k):
        for dx in range(k):
            oy, ox = dy - p, dx - p
            masks[dy * k + dx] = (in_img & (row >= -oy) & (row < H - oy)
                                  & (col >= -ox) & (col < W - ox)).astype(np.float32)
    return jnp.asarray(masks)


# ---------------------------------------------------------------------------
# Fully fused Bottleneck kernel: one grid step == one image.
# ---------------------------------------------------------------------------
def _make_bottleneck_kernel(M, G, ksizes, H, W, hw_real, hw_pad, has_short):
    inv_hw = 1.0 / float(hw_real)
    use_pix = hw_pad != hw_real

    def kernel(*refs):
        it = iter(refs)
        x_ref = next(it)           # (1, Cin, HWp) f32
        wr_ref = next(it)          # (D, Cin) bf16 (bn_reduce scale folded)
        br_ref = next(it)          # (D, 1) f32
        pix_ref = next(it)         # (1, HWp) f32
        branch_refs = []
        for k in ksizes:
            wb = next(it)          # (G, D/G, k*k*D/G) bf16 (branch BN scale folded)
            bb = next(it)          # (D, 1) f32
            mk = next(it) if k > 1 else None    # (k*k, HWp) f32
            branch_refs.append((k, wb, bb, mk))
        fcw_ref = next(it)         # (d, D) f32
        fcb_ref = next(it)         # (d, 1) f32
        fcsw_ref = next(it)        # (M, D, d) f32
        fcsb_ref = next(it)        # (M, D, 1) f32
        mid_ref = next(it)         # (D, 2) f32  [bn_mid scale, bias]
        we_ref = next(it)          # (Cout, D) bf16 (bn_expand scale folded)
        be_ref = next(it)          # (Cout, 1) f32
        if has_short:
            ws_ref = next(it)      # (Cout, Cin) bf16 (bn_short scale folded)
            bs_ref = next(it)      # (Cout, 1) f32
        out_ref = next(it)         # (1, Cout, HWp) f32

        x = x_ref[0]
        x_bf = x.astype(jnp.bfloat16)

        # conv_reduce (1x1) + bn_reduce + relu  --> one MXU matmul + bias add.
        y = jnp.dot(wr_ref[...], x_bf, preferred_element_type=jnp.float32) + br_ref[...]
        y = jnp.maximum(y, 0.0)                                    # (D, HWp) f32
        D = y.shape[0]
        cg = D // G

        # --- SK branches: grouped conv (k = 1, 3, ...) + bias/BN + relu -------
        feas = []
        for (k, wb_ref, bb_ref, mk_ref) in branch_refs:
            parts = []
            if k == 1:
                for g in range(G):
                    xg = y[g * cg:(g + 1) * cg].astype(jnp.bfloat16)
                    parts.append(jnp.dot(wb_ref[g], xg,
                                         preferred_element_type=jnp.float32))
            else:
                p = (k - 1) // 2
                # lane-shift + precomputed boundary mask per tap, then
                # concatenate taps along the contraction axis: one fat matmul
                # per group (K = k*k*cg) instead of k*k tiny ones.
                planes = []
                for dy in range(k):
                    for dx in range(k):
                        off = (dy - p) * W + (dx - p)
                        sh = y if off == 0 else jnp.roll(y, -off, axis=1)
                        t = dy * k + dx
                        planes.append(sh * mk_ref[t:t + 1, :])
                for g in range(G):
                    taps_g = jnp.concatenate(
                        [pln[g * cg:(g + 1) * cg] for pln in planes],
                        axis=0).astype(jnp.bfloat16)        # (k*k*cg, HWp)
                    parts.append(jnp.dot(wb_ref[g], taps_g,
                                         preferred_element_type=jnp.float32))
            conv = jnp.concatenate(parts, axis=0)            # (D, HWp) f32
            feas.append(jnp.maximum(conv + bb_ref[...], 0.0))

        # --- SK attention: GAP -> fc -> fcs -> softmax over branches ----------
        fea_u = feas[0]
        for m in range(1, M):
            fea_u = fea_u + feas[m]
        if use_pix:
            fea_u = fea_u * pix_ref[...]                      # drop padded lanes
        gap = jnp.sum(fea_u, axis=1, keepdims=True) * inv_hw             # (D, 1)
        z = jnp.dot(fcw_ref[...], gap,
                    preferred_element_type=jnp.float32) + fcb_ref[...]    # (d, 1)
        logits = [jnp.dot(fcsw_ref[m], z,
                          preferred_element_type=jnp.float32) + fcsb_ref[m]
                  for m in range(M)]                                       # (D, 1)
        mx = logits[0]
        for m in range(1, M):
            mx = jnp.maximum(mx, logits[m])
        exps = [jnp.exp(lg - mx) for lg in logits]
        den = exps[0]
        for m in range(1, M):
            den = den + exps[m]
        inv_den = pl.reciprocal(den, approx=True)

        # weighted branch sum with bn_mid scale folded into attention weights
        s_mid = mid_ref[:, 0:1]
        b_mid = mid_ref[:, 1:2]
        fv = (exps[0] * inv_den * s_mid) * feas[0]
        for m in range(1, M):
            fv = fv + (exps[m] * inv_den * s_mid) * feas[m]
        v = jnp.maximum(fv + b_mid, 0.0).astype(jnp.bfloat16)   # relu(bn_mid(.))

        # conv_expand (1x1) + bn_expand, shortcut, residual add, final relu
        out = jnp.dot(we_ref[...], v,
                      preferred_element_type=jnp.float32) + be_ref[...]
        if has_short:
            sc = jnp.dot(ws_ref[...], x_bf,
                         preferred_element_type=jnp.float32) + bs_ref[...]
        else:
            sc = x
        out_ref[0] = jnp.maximum(sc + out, 0.0)

    return kernel


# ---------------------------------------------------------------------------
# Full Bottleneck forward (Pallas path).
# ---------------------------------------------------------------------------
def bottleneck_forward(x, params, cfg):
    B, Cin, H, W = x.shape
    Cout = cfg["out_channels"]
    M, G = cfg["M"], cfg["G"]
    D = params["reduce_w4"].shape[0]
    # TODO(synk): stride > 1 (spatial downsampling) not implemented in Pallas path.
    assert cfg["stride"] == 1
    assert D % G == 0
    hw = H * W
    hw_pad = _round_up(hw, 128)           # lane-dense stores for any H*W
    ksizes = [1 + 2 * i for i in range(M)]
    og = cg = D // G
    has_short = cfg["in_channels"] != cfg["out_channels"]

    # activations in lane-dense (B, C, HWp) layout (free reshape + zero pad)
    x2 = x.reshape(B, Cin, hw).astype(jnp.float32)
    if hw_pad != hw:
        x2 = jnp.pad(x2, ((0, 0), (0, 0), (0, hw_pad - hw)))

    inputs, in_specs = [], []

    def add_full(arr):
        nd = arr.ndim
        inputs.append(arr)
        in_specs.append(pl.BlockSpec(arr.shape, lambda b, _nd=nd: (0,) * _nd))

    inputs.append(x2)
    in_specs.append(pl.BlockSpec((1, Cin, hw_pad), lambda b: (b, 0, 0)))

    # conv_reduce + bn_reduce (scale folded into weight rows)
    s_r, b_r = _fold_bn(params["bn_reduce"])
    add_full((params["reduce_w4"][:, :, 0, 0] * s_r[:, None]).astype(jnp.bfloat16))
    add_full(b_r[:, None])

    # pixel-valid mask (only used when HW was padded)
    add_full(jnp.asarray((np.arange(hw_pad) < hw).astype(np.float32))[None, :])

    # SK branches: per-group, tap-concatenated weights with branch BN folded in
    for i, k in enumerate(ksizes):
        s_i, b_i = _fold_bn(params["sk_bn"][i], conv_bias=params["sk_conv_b"][i])
        w = params["sk_conv_w"][i] * s_i[:, None, None, None]      # (D, cg, k, k)
        wg = jnp.stack(
            [jnp.transpose(w[g * og:(g + 1) * og], (0, 2, 3, 1)).reshape(og, k * k * cg)
             for g in range(G)], axis=0).astype(jnp.bfloat16)       # (G, og, k*k*cg)
        add_full(wg)
        add_full(b_i[:, None])
        if k > 1:
            add_full(_tap_masks(k, H, W, hw_pad))

    # SK attention fc / fcs parameters (kept f32 — tiny, precision-sensitive)
    add_full(params["fc_w"].astype(jnp.float32))                       # (d, D)
    add_full(params["fc_b"].astype(jnp.float32)[:, None])              # (d, 1)
    add_full(jnp.stack(params["fcs_w"]).astype(jnp.float32))           # (M, D, d)
    add_full(jnp.stack(params["fcs_b"]).astype(jnp.float32)[:, :, None])  # (M, D, 1)

    # bn_mid (scale/bias), expand + bn_expand, shortcut + bn_short
    s_m, b_m = _fold_bn(params["bn_mid"])
    add_full(jnp.stack([s_m, b_m], axis=1))                            # (D, 2)

    s_e, b_e = _fold_bn(params["bn_expand"])
    add_full((params["expand_w4"][:, :, 0, 0] * s_e[:, None]).astype(jnp.bfloat16))
    add_full(b_e[:, None])

    if has_short:
        s_s, b_s = _fold_bn(params["bn_short"])
        add_full((params["short_w4"][:, :, 0, 0] * s_s[:, None]).astype(jnp.bfloat16))
        add_full(b_s[:, None])

    flops = 2 * B * hw_pad * (D * Cin + sum(D * k * k * cg for k in ksizes)
                              + Cout * D + (Cout * Cin if has_short else 0))
    bytes_accessed = 4 * B * hw_pad * (Cin + Cout) + 2 * B * hw_pad * 3 * D

    out = pl.pallas_call(
        _make_bottleneck_kernel(M, G, ksizes, H, W, hw, hw_pad, has_short),
        out_shape=jax.ShapeDtypeStruct((B, Cout, hw_pad), jnp.float32),
        grid=(B,),
        in_specs=in_specs,
        out_specs=pl.BlockSpec((1, Cout, hw_pad), lambda b: (b, 0, 0)),
        compiler_params=pltpu.CompilerParams(dimension_semantics=("parallel",)),
        cost_estimate=pl.CostEstimate(flops=flops, transcendentals=B * M * D,
                                      bytes_accessed=bytes_accessed),
    )(*inputs)

    return out[:, :, :hw].reshape(B, Cout, H, W)


# ---------------------------------------------------------------------------
# Pure-JAX reference (inference-mode BN), for correctness checking.
# ---------------------------------------------------------------------------
def bottleneck_ref(x, params, cfg, eps=1e-5):
    hp = jax.lax.Precision.HIGHEST

    def bn(y, p):
        gamma, beta, mean, var = p
        inv = jax.lax.rsqrt(var + eps)
        return ((y - mean[None, :, None, None]) * (gamma * inv)[None, :, None, None]
                + beta[None, :, None, None])

    def conv(y, w, padding=0, groups=1, bias=None):
        out = jax.lax.conv_general_dilated(
            y, w, window_strides=(1, 1),
            padding=[(padding, padding), (padding, padding)],
            dimension_numbers=("NCHW", "OIHW", "NCHW"),
            feature_group_count=groups, precision=hp)
        if bias is not None:
            out = out + bias[None, :, None, None]
        return out

    relu = lambda v: jnp.maximum(v, 0.0)
    M, G = cfg["M"], cfg["G"]

    out = relu(bn(conv(x, params["reduce_w4"]), params["bn_reduce"]))
    feas = []
    for i in range(M):
        f = relu(bn(conv(out, params["sk_conv_w"][i], padding=i, groups=G,
                         bias=params["sk_conv_b"][i]), params["sk_bn"][i]))
        feas.append(f)
    feas_st = jnp.stack(feas, axis=1)                     # (B, M, D, H, W)
    fea_u = feas_st.sum(axis=1)
    fea_s = fea_u.mean(axis=(2, 3))                       # (B, D)
    fea_z = jnp.dot(fea_s, params["fc_w"].T, precision=hp) + params["fc_b"]
    att = jnp.stack(
        [jnp.dot(fea_z, params["fcs_w"][m].T, precision=hp) + params["fcs_b"][m]
         for m in range(M)], axis=1)                      # (B, M, D)
    att = jax.nn.softmax(att, axis=1)
    fea_v = (feas_st * att[:, :, :, None, None]).sum(axis=1)

    out2 = relu(bn(fea_v, params["bn_mid"]))
    out2 = bn(conv(out2, params["expand_w4"]), params["bn_expand"])
    if cfg["in_channels"] != cfg["out_channels"]:
        residual = bn(conv(x, params["short_w4"]), params["bn_short"])
    else:
        residual = x
    return relu(residual + out2)


if __name__ == "__main__":
    cfg = dict(in_channels=16, out_channels=64, stride=1, cardinality=2,
               base_width=8, expansion=1, M=2, r=2, L=8)
    cfg["G"] = cfg["cardinality"]

    width_ratio = cfg["out_channels"] / (cfg["expansion"] * 64.0)
    D = cfg["cardinality"] * int(cfg["base_width"] * width_ratio)   # 16
    d = max(int(D / cfg["r"]), cfg["L"])                            # 8
    M, G = cfg["M"], cfg["G"]

    B, H, W = 2, 16, 16
    key = jax.random.PRNGKey(0)
    kit = iter(jax.random.split(key, 32))

    def conv_init(k, co, ci, ks):
        fan_in = ci * ks * ks
        return jax.random.normal(k, (co, ci, ks, ks), jnp.float32) / math.sqrt(fan_in)

    def bn_init(k, c):
        k1, k2, k3, k4 = jax.random.split(k, 4)
        return (1.0 + 0.1 * jax.random.normal(k1, (c,), jnp.float32),
                0.1 * jax.random.normal(k2, (c,), jnp.float32),
                0.1 * jax.random.normal(k3, (c,), jnp.float32),
                0.5 + jax.random.uniform(k4, (c,), jnp.float32))

    def linear_init(k, co, ci):
        k1, k2 = jax.random.split(k)
        return (jax.random.normal(k1, (co, ci), jnp.float32) / math.sqrt(ci),
                0.1 * jax.random.normal(k2, (co,), jnp.float32))

    params = {
        "reduce_w4": conv_init(next(kit), D, cfg["in_channels"], 1),
        "bn_reduce": bn_init(next(kit), D),
        "sk_conv_w": [conv_init(next(kit), D, D // G, 1 + 2 * i) for i in range(M)],
        "sk_conv_b": [0.1 * jax.random.normal(next(kit), (D,), jnp.float32)
                      for _ in range(M)],
        "sk_bn": [bn_init(next(kit), D) for _ in range(M)],
        "bn_mid": bn_init(next(kit), D),
        "expand_w4": conv_init(next(kit), cfg["out_channels"], D, 1),
        "bn_expand": bn_init(next(kit), cfg["out_channels"]),
        "short_w4": conv_init(next(kit), cfg["out_channels"], cfg["in_channels"], 1),
        "bn_short": bn_init(next(kit), cfg["out_channels"]),
    }
    params["fc_w"], params["fc_b"] = linear_init(next(kit), d, D)
    fcs = [linear_init(next(kit), D, d) for _ in range(M)]
    params["fcs_w"] = [w for w, _ in fcs]
    params["fcs_b"] = [b for _, b in fcs]

    x = jax.random.normal(next(kit), (B, cfg["in_channels"], H, W), jnp.float32)

    fwd = jax.jit(lambda xx, pp: bottleneck_forward(xx, pp, cfg))
    out = jax.block_until_ready(fwd(x, params))

    ref = bottleneck_ref(x, params, cfg)
    # bf16 MXU inputs (weights + activations) vs f32-HIGHEST reference.
    np.testing.assert_allclose(np.asarray(out), np.asarray(ref),
                               rtol=3e-2, atol=2e-2)
    print("KERNEL_OK")
</pallas_src>

<mosaic_0001>
module attributes {stable_mosaic.version = 11 : i64} {
  func.func @kernel(%arg0: i32, %arg1: memref<1x16x256xf32, #tpu.memory_space<vmem>>, %arg2: memref<16x16xbf16, #tpu.memory_space<vmem>>, %arg3: memref<16x1xf32, #tpu.memory_space<vmem>>, %arg4: memref<1x256xf32, #tpu.memory_space<vmem>>, %arg5: memref<2x8x8xbf16, #tpu.memory_space<vmem>>, %arg6: memref<16x1xf32, #tpu.memory_space<vmem>>, %arg7: memref<2x8x72xbf16, #tpu.memory_space<vmem>>, %arg8: memref<16x1xf32, #tpu.memory_space<vmem>>, %arg9: memref<9x256xf32, #tpu.memory_space<vmem>>, %arg10: memref<8x16xf32, #tpu.memory_space<vmem>>, %arg11: memref<8x1xf32, #tpu.memory_space<vmem>>, %arg12: memref<2x16x8xf32, #tpu.memory_space<vmem>>, %arg13: memref<2x16x1xf32, #tpu.memory_space<vmem>>, %arg14: memref<16x2xf32, #tpu.memory_space<vmem>>, %arg15: memref<64x16xbf16, #tpu.memory_space<vmem>>, %arg16: memref<64x1xf32, #tpu.memory_space<vmem>>, %arg17: memref<64x16xbf16, #tpu.memory_space<vmem>>, %arg18: memref<64x1xf32, #tpu.memory_space<vmem>>, %arg19: memref<1x64x256xf32, #tpu.memory_space<vmem>>) attributes {dimension_semantics = [#tpu.dimension_semantics<parallel>], iteration_bounds = array<i64: 2>, scalar_prefetch = 0 : i64, scratch_operands = 0 : i64, tpu.core_type = #tpu.core_type<tc>, window_params = [{transform_indices = @transform_0, window_bounds = array<i64: 1, 16, 256>}, {pipeline_mode = #tpu.pipeline_mode<synchronous>, transform_indices = @transform_1, window_bounds = array<i64: 16, 16>}, {pipeline_mode = #tpu.pipeline_mode<synchronous>, transform_indices = @transform_2, window_bounds = array<i64: 16, 1>}, {pipeline_mode = #tpu.pipeline_mode<synchronous>, transform_indices = @transform_3, window_bounds = array<i64: 1, 256>}, {pipeline_mode = #tpu.pipeline_mode<synchronous>, transform_indices = @transform_4, window_bounds = array<i64: 2, 8, 8>}, {pipeline_mode = #tpu.pipeline_mode<synchronous>, transform_indices = @transform_5, window_bounds = array<i64: 16, 1>}, {pipeline_mode = #tpu.pipeline_mode<synchronous>, transform_indices = @transform_6, window_bounds = array<i64: 2, 8, 72>}, {pipeline_mode = #tpu.pipeline_mode<synchronous>, transform_indices = @transform_7, window_bounds = array<i64: 16, 1>}, {pipeline_mode = #tpu.pipeline_mode<synchronous>, transform_indices = @transform_8, window_bounds = array<i64: 9, 256>}, {pipeline_mode = #tpu.pipeline_mode<synchronous>, transform_indices = @transform_9, window_bounds = array<i64: 8, 16>}, {pipeline_mode = #tpu.pipeline_mode<synchronous>, transform_indices = @transform_10, window_bounds = array<i64: 8, 1>}, {pipeline_mode = #tpu.pipeline_mode<synchronous>, transform_indices = @transform_11, window_bounds = array<i64: 2, 16, 8>}, {pipeline_mode = #tpu.pipeline_mode<synchronous>, transform_indices = @transform_12, window_bounds = array<i64: 2, 16, 1>}, {pipeline_mode = #tpu.pipeline_mode<synchronous>, transform_indices = @transform_13, window_bounds = array<i64: 16, 2>}, {pipeline_mode = #tpu.pipeline_mode<synchronous>, transform_indices = @transform_14, window_bounds = array<i64: 64, 16>}, {pipeline_mode = #tpu.pipeline_mode<synchronous>, transform_indices = @transform_15, window_bounds = array<i64: 64, 1>}, {pipeline_mode = #tpu.pipeline_mode<synchronous>, transform_indices = @transform_16, window_bounds = array<i64: 64, 16>}, {pipeline_mode = #tpu.pipeline_mode<synchronous>, transform_indices = @transform_17, window_bounds = array<i64: 64, 1>}, {transform_indices = @transform_18, window_bounds = array<i64: 1, 64, 256>}]} {
    %c0 = arith.constant 0 : index
    %c0_0 = arith.constant 0 : index
    %c0_1 = arith.constant 0 : index
    %0 = vector.load %arg1[%c0, %c0_0, %c0_1] : memref<1x16x256xf32, #tpu.memory_space<vmem>>, vector<1x16x256xf32>
    %1 = vector.shape_cast %0 : vector<1x16x256xf32> to vector<16x256xf32>
    %2 = arith.truncf %1 : vector<16x256xf32> to vector<16x256xbf16>
    %c0_2 = arith.constant 0 : index
    %c0_3 = arith.constant 0 : index
    %3 = vector.load %arg2[%c0_2, %c0_3] : memref<16x16xbf16, #tpu.memory_space<vmem>>, vector<16x16xbf16>
    %cst = arith.constant dense<0.000000e+00> : vector<16x256xf32>
    %4 = tpu.matmul %3, %2, %cst {dimension_numbers = #tpu.dot_dimension_numbers<[1], [0], [0], [1], [0, 0, 1, 1], [], []>} : vector<16x16xbf16>, vector<16x256xbf16>, vector<16x256xf32> -> vector<16x256xf32>
    %c0_4 = arith.constant 0 : index
    %c0_5 = arith.constant 0 : index
    %5 = vector.load %arg3[%c0_4, %c0_5] : memref<16x1xf32, #tpu.memory_space<vmem>>, vector<16x1xf32>
    %6 = vector.broadcast %5 : vector<16x1xf32> to vector<16x256xf32>
    %7 = arith.addf %4, %6 : vector<16x256xf32>
    %cst_6 = arith.constant 0.000000e+00 : f32
    %8 = vector.broadcast %cst_6 : f32 to vector<16x256xf32>
    %9 = arith.maximumf %7, %8 : vector<16x256xf32>
    %10 = vector.extract_strided_slice %9 {offsets = [0, 0], sizes = [8, 256], strides = [1, 1]} : vector<16x256xf32> to vector<8x256xf32>
    %11 = arith.truncf %10 : vector<8x256xf32> to vector<8x256xbf16>
    %c0_7 = arith.constant 0 : index
    %c0_8 = arith.constant 0 : index
    %c0_9 = arith.constant 0 : index
    %12 = vector.load %arg5[%c0_7, %c0_8, %c0_9] : memref<2x8x8xbf16, #tpu.memory_space<vmem>>, vector<1x8x8xbf16>
    %13 = vector.shape_cast %12 : vector<1x8x8xbf16> to vector<8x8xbf16>
    %cst_10 = arith.constant dense<0.000000e+00> : vector<8x256xf32>
    %14 = tpu.matmul %13, %11, %cst_10 {dimension_numbers = #tpu.dot_dimension_numbers<[1], [0], [0], [1], [0, 0, 1, 1], [], []>} : vector<8x8xbf16>, vector<8x256xbf16>, vector<8x256xf32> -> vector<8x256xf32>
    %15 = vector.extract_strided_slice %9 {offsets = [8, 0], sizes = [8, 256], strides = [1, 1]} : vector<16x256xf32> to vector<8x256xf32>
    %16 = arith.truncf %15 : vector<8x256xf32> to vector<8x256xbf16>
    %c1 = arith.constant 1 : index
    %c0_11 = arith.constant 0 : index
    %c0_12 = arith.constant 0 : index
    %17 = vector.load %arg5[%c1, %c0_11, %c0_12] : memref<2x8x8xbf16, #tpu.memory_space<vmem>>, vector<1x8x8xbf16>
    %18 = vector.shape_cast %17 : vector<1x8x8xbf16> to vector<8x8xbf16>
    %cst_13 = arith.constant dense<0.000000e+00> : vector<8x256xf32>
    %19 = tpu.matmul %18, %16, %cst_13 {dimension_numbers = #tpu.dot_dimension_numbers<[1], [0], [0], [1], [0, 0, 1, 1], [], []>} : vector<8x8xbf16>, vector<8x256xbf16>, vector<8x256xf32> -> vector<8x256xf32>
    %20 = tpu.concatenate %14, %19 in 0 : vector<8x256xf32>, vector<8x256xf32> -> vector<16x256xf32>
    %c0_14 = arith.constant 0 : index
    %c0_15 = arith.constant 0 : index
    %21 = vector.load %arg6[%c0_14, %c0_15] : memref<16x1xf32, #tpu.memory_space<vmem>>, vector<16x1xf32>
    %22 = vector.broadcast %21 : vector<16x1xf32> to vector<16x256xf32>
    %23 = arith.addf %20, %22 : vector<16x256xf32>
    %cst_16 = arith.constant 0.000000e+00 : f32
    %24 = vector.broadcast %cst_16 : f32 to vector<16x256xf32>
    %25 = arith.maximumf %23, %24 : vector<16x256xf32>
    %26 = vector.extract_strided_slice %9 {offsets = [0, 239], sizes = [16, 17], strides = [1, 1]} : vector<16x256xf32> to vector<16x17xf32>
    %27 = vector.extract_strided_slice %9 {offsets = [0, 0], sizes = [16, 239], strides = [1, 1]} : vector<16x256xf32> to vector<16x239xf32>
    %28 = tpu.concatenate %26, %27 in 1 : vector<16x17xf32>, vector<16x239xf32> -> vector<16x256xf32>
    %c0_17 = arith.constant 0 : index
    %c0_18 = arith.constant 0 : index
    %29 = vector.load %arg9[%c0_17, %c0_18] : memref<9x256xf32, #tpu.memory_space<vmem>>, vector<1x256xf32>
    %30 = vector.broadcast %29 : vector<1x256xf32> to vector<16x256xf32>
    %31 = arith.mulf %28, %30 : vector<16x256xf32>
    %32 = vector.extract_strided_slice %9 {offsets = [0, 240], sizes = [16, 16], strides = [1, 1]} : vector<16x256xf32> to vector<16x16xf32>
    %33 = vector.extract_strided_slice %9 {offsets = [0, 0], sizes = [16, 240], strides = [1, 1]} : vector<16x256xf32> to vector<16x240xf32>
    %34 = tpu.concatenate %32, %33 in 1 : vector<16x16xf32>, vector<16x240xf32> -> vector<16x256xf32>
    %c1_19 = arith.constant 1 : index
    %c0_20 = arith.constant 0 : index
    %35 = vector.load %arg9[%c1_19, %c0_20] : memref<9x256xf32, #tpu.memory_space<vmem>>, vector<1x256xf32>
    %36 = vector.broadcast %35 : vector<1x256xf32> to vector<16x256xf32>
    %37 = arith.mulf %34, %36 : vector<16x256xf32>
    %38 = vector.extract_strided_slice %9 {offsets = [0, 241], sizes = [16, 15], strides = [1, 1]} : vector<16x256xf32> to vector<16x15xf32>
    %39 = vector.extract_strided_slice %9 {offsets = [0, 0], sizes = [16, 241], strides = [1, 1]} : vector<16x256xf32> to vector<16x241xf32>
    %40 = tpu.concatenate %38, %39 in 1 : vector<16x15xf32>, vector<16x241xf32> -> vector<16x256xf32>
    %c2 = arith.constant 2 : index
    %c0_21 = arith.constant 0 : index
    %41 = vector.load %arg9[%c2, %c0_21] : memref<9x256xf32, #tpu.memory_space<vmem>>, vector<1x256xf32>
    %42 = vector.broadcast %41 : vector<1x256xf32> to vector<16x256xf32>
    %43 = arith.mulf %40, %42 : vector<16x256xf32>
    %44 = vector.extract_strided_slice %9 {offsets = [0, 255], sizes = [16, 1], strides = [1, 1]} : vector<16x256xf32> to vector<16x1xf32>
    %45 = vector.extract_strided_slice %9 {offsets = [0, 0], sizes = [16, 255], strides = [1, 1]} : vector<16x256xf32> to vector<16x255xf32>
    %46 = tpu.concatenate %44, %45 in 1 : vector<16x1xf32>, vector<16x255xf32> -> vector<16x256xf32>
    %c3 = arith.constant 3 : index
    %c0_22 = arith.constant 0 : index
    %47 = vector.load %arg9[%c3, %c0_22] : memref<9x256xf32, #tpu.memory_space<vmem>>, vector<1x256xf32>
    %48 = vector.broadcast %47 : vector<1x256xf32> to vector<16x256xf32>
    %49 = arith.mulf %46, %48 : vector<16x256xf32>
    %c4 = arith.constant 4 : index
    %c0_23 = arith.constant 0 : index
    %50 = vector.load %arg9[%c4, %c0_23] : memref<9x256xf32, #tpu.memory_space<vmem>>, vector<1x256xf32>
    %51 = vector.broadcast %50 : vector<1x256xf32> to vector<16x256xf32>
    %52 = arith.mulf %9, %51 : vector<16x256xf32>
    %53 = vector.extract_strided_slice %9 {offsets = [0, 1], sizes = [16, 255], strides = [1, 1]} : vector<16x256xf32> to vector<16x255xf32>
    %54 = vector.extract_strided_slice %9 {offsets = [0, 0], sizes = [16, 1], strides = [1, 1]} : vector<16x256xf32> to vector<16x1xf32>
    %55 = tpu.concatenate %53, %54 in 1 : vector<16x255xf32>, vector<16x1xf32> -> vector<16x256xf32>
    %c5 = arith.constant 5 : index
    %c0_24 = arith.constant 0 : index
    %56 = vector.load %arg9[%c5, %c0_24] : memref<9x256xf32, #tpu.memory_space<vmem>>, vector<1x256xf32>
    %57 = vector.broadcast %56 : vector<1x256xf32> to vector<16x256xf32>
    %58 = arith.mulf %55, %57 : vector<16x256xf32>
    %59 = vector.extract_strided_slice %9 {offsets = [0, 15], sizes = [16, 241], strides = [1, 1]} : vector<16x256xf32> to vector<16x241xf32>
    %60 = vector.extract_strided_slice %9 {offsets = [0, 0], sizes = [16, 15], strides = [1, 1]} : vector<16x256xf32> to vector<16x15xf32>
    %61 = tpu.concatenate %59, %60 in 1 : vector<16x241xf32>, vector<16x15xf32> -> vector<16x256xf32>
    %c6 = arith.constant 6 : index
    %c0_25 = arith.constant 0 : index
    %62 = vector.load %arg9[%c6, %c0_25] : memref<9x256xf32, #tpu.memory_space<vmem>>, vector<1x256xf32>
    %63 = vector.broadcast %62 : vector<1x256xf32> to vector<16x256xf32>
    %64 = arith.mulf %61, %63 : vector<16x256xf32>
    %65 = vector.extract_strided_slice %9 {offsets = [0, 16], sizes = [16, 240], strides = [1, 1]} : vector<16x256xf32> to vector<16x240xf32>
    %66 = vector.extract_strided_slice %9 {offsets = [0, 0], sizes = [16, 16], strides = [1, 1]} : vector<16x256xf32> to vector<16x16xf32>
    %67 = tpu.concatenate %65, %66 in 1 : vector<16x240xf32>, vector<16x16xf32> -> vector<16x256xf32>
    %c7 = arith.constant 7 : index
    %c0_26 = arith.constant 0 : index
    %68 = vector.load %arg9[%c7, %c0_26] : memref<9x256xf32, #tpu.memory_space<vmem>>, vector<1x256xf32>
    %69 = vector.broadcast %68 : vector<1x256xf32> to vector<16x256xf32>
    %70 = arith.mulf %67, %69 : vector<16x256xf32>
    %71 = vector.extract_strided_slice %9 {offsets = [0, 17], sizes = [16, 239], strides = [1, 1]} : vector<16x256xf32> to vector<16x239xf32>
    %72 = vector.extract_strided_slice %9 {offsets = [0, 0], sizes = [16, 17], strides = [1, 1]} : vector<16x256xf32> to vector<16x17xf32>
    %73 = tpu.concatenate %71, %72 in 1 : vector<16x239xf32>, vector<16x17xf32> -> vector<16x256xf32>
    %c8 = arith.constant 8 : index
    %c0_27 = arith.constant 0 : index
    %74 = vector.load %arg9[%c8, %c0_27] : memref<9x256xf32, #tpu.memory_space<vmem>>, vector<1x256xf32>
    %75 = vector.broadcast %74 : vector<1x256xf32> to vector<16x256xf32>
    %76 = arith.mulf %73, %75 : vector<16x256xf32>
    %77 = vector.extract_strided_slice %31 {offsets = [0, 0], sizes = [8, 256], strides = [1, 1]} : vector<16x256xf32> to vector<8x256xf32>
    %78 = vector.extract_strided_slice %37 {offsets = [0, 0], sizes = [8, 256], strides = [1, 1]} : vector<16x256xf32> to vector<8x256xf32>
    %79 = vector.extract_strided_slice %43 {offsets = [0, 0], sizes = [8, 256], strides = [1, 1]} : vector<16x256xf32> to vector<8x256xf32>
    %80 = vector.extract_strided_slice %49 {offsets = [0, 0], sizes = [8, 256], strides = [1, 1]} : vector<16x256xf32> to vector<8x256xf32>
    %81 = vector.extract_strided_slice %52 {offsets = [0, 0], sizes = [8, 256], strides = [1, 1]} : vector<16x256xf32> to vector<8x256xf32>
    %82 = vector.extract_strided_slice %58 {offsets = [0, 0], sizes = [8, 256], strides = [1, 1]} : vector<16x256xf32> to vector<8x256xf32>
    %83 = vector.extract_strided_slice %64 {offsets = [0, 0], sizes = [8, 256], strides = [1, 1]} : vector<16x256xf32> to vector<8x256xf32>
    %84 = vector.extract_strided_slice %70 {offsets = [0, 0], sizes = [8, 256], strides = [1, 1]} : vector<16x256xf32> to vector<8x256xf32>
    %85 = vector.extract_strided_slice %76 {offsets = [0, 0], sizes = [8, 256], strides = [1, 1]} : vector<16x256xf32> to vector<8x256xf32>
    %86 = tpu.concatenate %77, %78, %79, %80, %81, %82, %83, %84, %85 in 0 : vector<8x256xf32>, vector<8x256xf32>, vector<8x256xf32>, vector<8x256xf32>, vector<8x256xf32>, vector<8x256xf32>, vector<8x256xf32>, vector<8x256xf32>, vector<8x256xf32> -> vector<72x256xf32>
    %87 = arith.truncf %86 : vector<72x256xf32> to vector<72x256xbf16>
    %c0_28 = arith.constant 0 : index
    %c0_29 = arith.constant 0 : index
    %c0_30 = arith.constant 0 : index
    %88 = vector.load %arg7[%c0_28, %c0_29, %c0_30] : memref<2x8x72xbf16, #tpu.memory_space<vmem>>, vector<1x8x72xbf16>
    %89 = vector.shape_cast %88 : vector<1x8x72xbf16> to vector<8x72xbf16>
    %cst_31 = arith.constant dense<0.000000e+00> : vector<8x256xf32>
    %90 = tpu.matmul %89, %87, %cst_31 {dimension_numbers = #tpu.dot_dimension_numbers<[1], [0], [0], [1], [0, 0, 1, 1], [], []>} : vector<8x72xbf16>, vector<72x256xbf16>, vector<8x256xf32> -> vector<8x256xf32>
    %91 = vector.extract_strided_slice %31 {offsets = [8, 0], sizes = [8, 256], strides = [1, 1]} : vector<16x256xf32> to vector<8x256xf32>
    %92 = vector.extract_strided_slice %37 {offsets = [8, 0], sizes = [8, 256], strides = [1, 1]} : vector<16x256xf32> to vector<8x256xf32>
    %93 = vector.extract_strided_slice %43 {offsets = [8, 0], sizes = [8, 256], strides = [1, 1]} : vector<16x256xf32> to vector<8x256xf32>
    %94 = vector.extract_strided_slice %49 {offsets = [8, 0], sizes = [8, 256], strides = [1, 1]} : vector<16x256xf32> to vector<8x256xf32>
    %95 = vector.extract_strided_slice %52 {offsets = [8, 0], sizes = [8, 256], strides = [1, 1]} : vector<16x256xf32> to vector<8x256xf32>
    %96 = vector.extract_strided_slice %58 {offsets = [8, 0], sizes = [8, 256], strides = [1, 1]} : vector<16x256xf32> to vector<8x256xf32>
    %97 = vector.extract_strided_slice %64 {offsets = [8, 0], sizes = [8, 256], strides = [1, 1]} : vector<16x256xf32> to vector<8x256xf32>
    %98 = vector.extract_strided_slice %70 {offsets = [8, 0], sizes = [8, 256], strides = [1, 1]} : vector<16x256xf32> to vector<8x256xf32>
    %99 = vector.extract_strided_slice %76 {offsets = [8, 0], sizes = [8, 256], strides = [1, 1]} : vector<16x256xf32> to vector<8x256xf32>
    %100 = tpu.concatenate %91, %92, %93, %94, %95, %96, %97, %98, %99 in 0 : vector<8x256xf32>, vector<8x256xf32>, vector<8x256xf32>, vector<8x256xf32>, vector<8x256xf32>, vector<8x256xf32>, vector<8x256xf32>, vector<8x256xf32>, vector<8x256xf32> -> vector<72x256xf32>
    %101 = arith.truncf %100 : vector<72x256xf32> to vector<72x256xbf16>
    %c1_32 = arith.constant 1 : index
    %c0_33 = arith.constant 0 : index
    %c0_34 = arith.constant 0 : index
    %102 = vector.load %arg7[%c1_32, %c0_33, %c0_34] : memref<2x8x72xbf16, #tpu.memory_space<vmem>>, vector<1x8x72xbf16>
    %103 = vector.shape_cast %102 : vector<1x8x72xbf16> to vector<8x72xbf16>
    %cst_35 = arith.constant dense<0.000000e+00> : vector<8x256xf32>
    %104 = tpu.matmul %103, %101, %cst_35 {dimension_numbers = #tpu.dot_dimension_numbers<[1], [0], [0], [1], [0, 0, 1, 1], [], []>} : vector<8x72xbf16>, vector<72x256xbf16>, vector<8x256xf32> -> vector<8x256xf32>
    %105 = tpu.concatenate %90, %104 in 0 : vector<8x256xf32>, vector<8x256xf32> -> vector<16x256xf32>
    %c0_36 = arith.constant 0 : index
    %c0_37 = arith.constant 0 : index
    %106 = vector.load %arg8[%c0_36, %c0_37] : memref<16x1xf32, #tpu.memory_space<vmem>>, vector<16x1xf32>
    %107 = vector.broadcast %106 : vector<16x1xf32> to vector<16x256xf32>
    %108 = arith.addf %105, %107 : vector<16x256xf32>
    %cst_38 = arith.constant 0.000000e+00 : f32
    %109 = vector.broadcast %cst_38 : f32 to vector<16x256xf32>
    %110 = arith.maximumf %108, %109 : vector<16x256xf32>
    %111 = arith.addf %25, %110 : vector<16x256xf32>
    %cst_39 = arith.constant dense<0.000000e+00> : vector<16xf32>
    %112 = vector.multi_reduction <add>, %111, %cst_39 [1] : vector<16x256xf32> to vector<16xf32>
    %113 = vector.shape_cast %112 : vector<16xf32> to vector<16x1xf32>
    %cst_40 = arith.constant 3.906250e-03 : f32
    %114 = vector.broadcast %cst_40 : f32 to vector<16x1xf32>
    %115 = arith.mulf %113, %114 : vector<16x1xf32>
    %c0_41 = arith.constant 0 : index
    %c0_42 = arith.constant 0 : index
    %116 = vector.load %arg10[%c0_41, %c0_42] : memref<8x16xf32, #tpu.memory_space<vmem>>, vector<8x16xf32>
    %cst_43 = arith.constant dense<0.000000e+00> : vector<8x1xf32>
    %117 = tpu.matmul %116, %115, %cst_43 {dimension_numbers = #tpu.dot_dimension_numbers<[1], [0], [0], [1], [0, 0, 1, 1], [], []>} : vector<8x16xf32>, vector<16x1xf32>, vector<8x1xf32> -> vector<8x1xf32>
    %c0_44 = arith.constant 0 : index
    %c0_45 = arith.constant 0 : index
    %118 = vector.load %arg11[%c0_44, %c0_45] : memref<8x1xf32, #tpu.memory_space<vmem>>, vector<8x1xf32>
    %119 = arith.addf %117, %118 : vector<8x1xf32>
    %c0_46 = arith.constant 0 : index
    %c0_47 = arith.constant 0 : index
    %c0_48 = arith.constant 0 : index
    %120 = vector.load %arg12[%c0_46, %c0_47, %c0_48] : memref<2x16x8xf32, #tpu.memory_space<vmem>>, vector<1x16x8xf32>
    %121 = vector.shape_cast %120 : vector<1x16x8xf32> to vector<16x8xf32>
    %cst_49 = arith.constant dense<0.000000e+00> : vector<16x1xf32>
    %122 = tpu.matmul %121, %119, %cst_49 {dimension_numbers = #tpu.dot_dimension_numbers<[1], [0], [0], [1], [0, 0, 1, 1], [], []>} : vector<16x8xf32>, vector<8x1xf32>, vector<16x1xf32> -> vector<16x1xf32>
    %c0_50 = arith.constant 0 : index
    %c0_51 = arith.constant 0 : index
    %c0_52 = arith.constant 0 : index
    %123 = vector.load %arg13[%c0_50, %c0_51, %c0_52] : memref<2x16x1xf32, #tpu.memory_space<vmem>>, vector<1x16x1xf32>
    %124 = vector.shape_cast %123 : vector<1x16x1xf32> to vector<16x1xf32>
    %125 = arith.addf %122, %124 : vector<16x1xf32>
    %c1_53 = arith.constant 1 : index
    %c0_54 = arith.constant 0 : index
    %c0_55 = arith.constant 0 : index
    %126 = vector.load %arg12[%c1_53, %c0_54, %c0_55] : memref<2x16x8xf32, #tpu.memory_space<vmem>>, vector<1x16x8xf32>
    %127 = vector.shape_cast %126 : vector<1x16x8xf32> to vector<16x8xf32>
    %cst_56 = arith.constant dense<0.000000e+00> : vector<16x1xf32>
    %128 = tpu.matmul %127, %119, %cst_56 {dimension_numbers = #tpu.dot_dimension_numbers<[1], [0], [0], [1], [0, 0, 1, 1], [], []>} : vector<16x8xf32>, vector<8x1xf32>, vector<16x1xf32> -> vector<16x1xf32>
    %c1_57 = arith.constant 1 : index
    %c0_58 = arith.constant 0 : index
    %c0_59 = arith.constant 0 : index
    %129 = vector.load %arg13[%c1_57, %c0_58, %c0_59] : memref<2x16x1xf32, #tpu.memory_space<vmem>>, vector<1x16x1xf32>
    %130 = vector.shape_cast %129 : vector<1x16x1xf32> to vector<16x1xf32>
    %131 = arith.addf %128, %130 : vector<16x1xf32>
    %132 = arith.maximumf %125, %131 : vector<16x1xf32>
    %133 = arith.subf %125, %132 : vector<16x1xf32>
    %134 = math.exp %133 : vector<16x1xf32>
    %135 = arith.subf %131, %132 : vector<16x1xf32>
    %136 = math.exp %135 : vector<16x1xf32>
    %137 = arith.addf %134, %136 : vector<16x1xf32>
    %138 = tpu.reciprocal %137 {approx = true} : vector<16x1xf32> -> vector<16x1xf32>
    %c0_60 = arith.constant 0 : index
    %c0_61 = arith.constant 0 : index
    %139 = vector.load %arg14[%c0_60, %c0_61] : memref<16x2xf32, #tpu.memory_space<vmem>>, vector<16x1xf32>
    %c0_62 = arith.constant 0 : index
    %c1_63 = arith.constant 1 : index
    %140 = vector.load %arg14[%c0_62, %c1_63] : memref<16x2xf32, #tpu.memory_space<vmem>>, vector<16x1xf32>
    %141 = arith.mulf %134, %138 : vector<16x1xf32>
    %142 = arith.mulf %141, %139 : vector<16x1xf32>
    %143 = vector.broadcast %142 : vector<16x1xf32> to vector<16x256xf32>
    %144 = arith.mulf %143, %25 : vector<16x256xf32>
    %145 = arith.mulf %136, %138 : vector<16x1xf32>
    %146 = arith.mulf %145, %139 : vector<16x1xf32>
    %147 = vector.broadcast %146 : vector<16x1xf32> to vector<16x256xf32>
    %148 = arith.mulf %147, %110 : vector<16x256xf32>
    %149 = arith.addf %144, %148 : vector<16x256xf32>
    %150 = vector.broadcast %140 : vector<16x1xf32> to vector<16x256xf32>
    %151 = arith.addf %149, %150 : vector<16x256xf32>
    %cst_64 = arith.constant 0.000000e+00 : f32
    %152 = vector.broadcast %cst_64 : f32 to vector<16x256xf32>
    %153 = arith.maximumf %151, %152 : vector<16x256xf32>
    %154 = arith.truncf %153 : vector<16x256xf32> to vector<16x256xbf16>
    %c0_65 = arith.constant 0 : index
    %c0_66 = arith.constant 0 : index
    %155 = vector.load %arg15[%c0_65, %c0_66] : memref<64x16xbf16, #tpu.memory_space<vmem>>, vector<64x16xbf16>
    %cst_67 = arith.constant dense<0.000000e+00> : vector<64x256xf32>
    %156 = tpu.matmul %155, %154, %cst_67 {dimension_numbers = #tpu.dot_dimension_numbers<[1], [0], [0], [1], [0, 0, 1, 1], [], []>} : vector<64x16xbf16>, vector<16x256xbf16>, vector<64x256xf32> -> vector<64x256xf32>
    %c0_68 = arith.constant 0 : index
    %c0_69 = arith.constant 0 : index
    %157 = vector.load %arg16[%c0_68, %c0_69] : memref<64x1xf32, #tpu.memory_space<vmem>>, vector<64x1xf32>
    %158 = vector.broadcast %157 : vector<64x1xf32> to vector<64x256xf32>
    %159 = arith.addf %156, %158 : vector<64x256xf32>
    %c0_70 = arith.constant 0 : index
    %c0_71 = arith.constant 0 : index
    %160 = vector.load %arg17[%c0_70, %c0_71] : memref<64x16xbf16, #tpu.memory_space<vmem>>, vector<64x16xbf16>
    %cst_72 = arith.constant dense<0.000000e+00> : vector<64x256xf32>
    %161 = tpu.matmul %160, %2, %cst_72 {dimension_numbers = #tpu.dot_dimension_numbers<[1], [0], [0], [1], [0, 0, 1, 1], [], []>} : vector<64x16xbf16>, vector<16x256xbf16>, vector<64x256xf32> -> vector<64x256xf32>
    %c0_73 = arith.constant 0 : index
    %c0_74 = arith.constant 0 : index
    %162 = vector.load %arg18[%c0_73, %c0_74] : memref<64x1xf32, #tpu.memory_space<vmem>>, vector<64x1xf32>
    %163 = vector.broadcast %162 : vector<64x1xf32> to vector<64x256xf32>
    %164 = arith.addf %161, %163 : vector<64x256xf32>
    %165 = arith.addf %164, %159 : vector<64x256xf32>
    %cst_75 = arith.constant 0.000000e+00 : f32
    %166 = vector.broadcast %cst_75 : f32 to vector<64x256xf32>
    %167 = arith.maximumf %165, %166 : vector<64x256xf32>
    %c0_76 = arith.constant 0 : index
    %c0_77 = arith.constant 0 : index
    %c0_78 = arith.constant 0 : index
    %168 = vector.load %arg19[%c0_76, %c0_77, %c0_78] : memref<1x64x256xf32, #tpu.memory_space<vmem>>, vector<1x64x256xf32>
    %169 = vector.shape_cast %168 : vector<1x64x256xf32> to vector<64x256xf32>
    %170 = vector.shape_cast %167 : vector<64x256xf32> to vector<1x64x256xf32>
    tpu.vector_store %arg19[%c0_76, %c0_77, %c0_78], %170 {strides = array<i32>} : memref<1x64x256xf32, #tpu.memory_space<vmem>>, vector<1x64x256xf32>,
    return
  }
  func.func @transform_0(%arg0: i32) -> (i32, i32, i32) {
    %c0_i32 = arith.constant 0 : i32
    %c0_i32_0 = arith.constant 0 : i32
    %c0_i32_1 = arith.constant 0 : i32
    return %arg0, %c0_i32, %c0_i32_0 : i32, i32, i32
  }
  func.func @transform_1(%arg0: i32) -> (i32, i32) {
    %c0_i32 = arith.constant 0 : i32
    %c0_i32_0 = arith.constant 0 : i32
    %c0_i32_1 = arith.constant 0 : i32
    return %c0_i32, %c0_i32_0 : i32, i32
  }
  func.func @transform_2(%arg0: i32) -> (i32, i32) {
    %c0_i32 = arith.constant 0 : i32
    %c0_i32_0 = arith.constant 0 : i32
    %c0_i32_1 = arith.constant 0 : i32
    return %c0_i32, %c0_i32_0 : i32, i32
  }
  func.func @transform_3(%arg0: i32) -> (i32, i32) {
    %c0_i32 = arith.constant 0 : i32
    %c0_i32_0 = arith.constant 0 : i32
    %c0_i32_1 = arith.constant 0 : i32
    return %c0_i32, %c0_i32_0 : i32, i32
  }
  func.func @transform_4(%arg0: i32) -> (i32, i32, i32) {
    %c0_i32 = arith.constant 0 : i32
    %c0_i32_0 = arith.constant 0 : i32
    %c0_i32_1 = arith.constant 0 : i32
    %c0_i32_2 = arith.constant 0 : i32
    return %c0_i32, %c0_i32_0, %c0_i32_1 : i32, i32, i32
  }
  func.func @transform_5(%arg0: i32) -> (i32, i32) {
    %c0_i32 = arith.constant 0 : i32
    %c0_i32_0 = arith.constant 0 : i32
    %c0_i32_1 = arith.constant 0 : i32
    return %c0_i32, %c0_i32_0 : i32, i32
  }
  func.func @transform_6(%arg0: i32) -> (i32, i32, i32) {
    %c0_i32 = arith.constant 0 : i32
    %c0_i32_0 = arith.constant 0 : i32
    %c0_i32_1 = arith.constant 0 : i32
    %c0_i32_2 = arith.constant 0 : i32
    return %c0_i32, %c0_i32_0, %c0_i32_1 : i32, i32, i32
  }
  func.func @transform_7(%arg0: i32) -> (i32, i32) {
    %c0_i32 = arith.constant 0 : i32
    %c0_i32_0 = arith.constant 0 : i32
    %c0_i32_1 = arith.constant 0 : i32
    return %c0_i32, %c0_i32_0 : i32, i32
  }
  func.func @transform_8(%arg0: i32) -> (i32, i32) {
    %c0_i32 = arith.constant 0 : i32
    %c0_i32_0 = arith.constant 0 : i32
    %c0_i32_1 = arith.constant 0 : i32
    return %c0_i32, %c0_i32_0 : i32, i32
  }
  func.func @transform_9(%arg0: i32) -> (i32, i32) {
    %c0_i32 = arith.constant 0 : i32
    %c0_i32_0 = arith.constant 0 : i32
    %c0_i32_1 = arith.constant 0 : i32
    return %c0_i32, %c0_i32_0 : i32, i32
  }
  func.func @transform_10(%arg0: i32) -> (i32, i32) {
    %c0_i32 = arith.constant 0 : i32
    %c0_i32_0 = arith.constant 0 : i32
    %c0_i32_1 = arith.constant 0 : i32
    return %c0_i32, %c0_i32_0 : i32, i32
  }
  func.func @transform_11(%arg0: i32) -> (i32, i32, i32) {
    %c0_i32 = arith.constant 0 : i32
    %c0_i32_0 = arith.constant 0 : i32
    %c0_i32_1 = arith.constant 0 : i32
    %c0_i32_2 = arith.constant 0 : i32
    return %c0_i32, %c0_i32_0, %c0_i32_1 : i32, i32, i32
  }
  func.func @transform_12(%arg0: i32) -> (i32, i32, i32) {
    %c0_i32 = arith.constant 0 : i32
    %c0_i32_0 = arith.constant 0 : i32
    %c0_i32_1 = arith.constant 0 : i32
    %c0_i32_2 = arith.constant 0 : i32
    return %c0_i32, %c0_i32_0, %c0_i32_1 : i32, i32, i32
  }
  func.func @transform_13(%arg0: i32) -> (i32, i32) {
    %c0_i32 = arith.constant 0 : i32
    %c0_i32_0 = arith.constant 0 : i32
    %c0_i32_1 = arith.constant 0 : i32
    return %c0_i32, %c0_i32_0 : i32, i32
  }
  func.func @transform_14(%arg0: i32) -> (i32, i32) {
    %c0_i32 = arith.constant 0 : i32
    %c0_i32_0 = arith.constant 0 : i32
    %c0_i32_1 = arith.constant 0 : i32
    return %c0_i32, %c0_i32_0 : i32, i32
  }
  func.func @transform_15(%arg0: i32) -> (i32, i32) {
    %c0_i32 = arith.constant 0 : i32
    %c0_i32_0 = arith.constant 0 : i32
    %c0_i32_1 = arith.constant 0 : i32
    return %c0_i32, %c0_i32_0 : i32, i32
  }
  func.func @transform_16(%arg0: i32) -> (i32, i32) {
    %c0_i32 = arith.constant 0 : i32
    %c0_i32_0 = arith.constant 0 : i32
    %c0_i32_1 = arith.constant 0 : i32
    return %c0_i32, %c0_i32_0 : i32, i32
  }
  func.func @transform_17(%arg0: i32) -> (i32, i32) {
    %c0_i32 = arith.constant 0 : i32
    %c0_i32_0 = arith.constant 0 : i32
    %c0_i32_1 = arith.constant 0 : i32
    return %c0_i32, %c0_i32_0 : i32, i32
  }
  func.func @transform_18(%arg0: i32) -> (i32, i32, i32) {
    %c0_i32 = arith.constant 0 : i32
    %c0_i32_0 = arith.constant 0 : i32
    %c0_i32_1 = arith.constant 0 : i32
    return %arg0, %c0_i32, %c0_i32_0 : i32, i32, i32
  }
}

</mosaic_0001>

<llo_original>
// kernel: _lambda_.1
$region0: #{_lambda_.1}
  #allocation0 [shape = 'u32[]', space=smem, size = 0x4, offset = 0x4, fixed_abs, tag = 'smem constant byte address 0x4 - core index']
  #allocation1 [shape = 'u32[144,128]{1,0:T(1,128)}', space=vmem, size = 0x12000, scoped, tag = 'internal scratch']
  %s0 = inlined_call_operand.vmem [shape: f32[2,16,256], index: 0, kind: input, shape index: {}]
  %s1 = inlined_call_operand.vmem [shape: bf16[16,16], index: 1, kind: input, shape index: {}]
  %s2 = inlined_call_operand.vmem [shape: f32[16,1], index: 2, kind: input, shape index: {}]
  %s3 = inlined_call_operand.vmem [shape: f32[1,256], index: 3, kind: input, shape index: {}]
  %s4 = inlined_call_operand.vmem [shape: bf16[2,8,8], index: 4, kind: input, shape index: {}]
  %s5 = inlined_call_operand.vmem [shape: f32[16,1], index: 5, kind: input, shape index: {}]
  %s6 = inlined_call_operand.vmem [shape: bf16[2,8,72], index: 6, kind: input, shape index: {}]
  %s7 = inlined_call_operand.vmem [shape: f32[16,1], index: 7, kind: input, shape index: {}]
  %s8 = inlined_call_operand.vmem [shape: f32[9,256], index: 8, kind: input, shape index: {}]
  %s9 = inlined_call_operand.vmem [shape: f32[8,16], index: 9, kind: input, shape index: {}]
  %s10 = inlined_call_operand.vmem [shape: f32[8,1], index: 10, kind: input, shape index: {}]
  %s11 = inlined_call_operand.vmem [shape: f32[2,16,8], index: 11, kind: input, shape index: {}]
  %s12 = inlined_call_operand.vmem [shape: f32[2,16,1], index: 12, kind: input, shape index: {}]
  %s13 = inlined_call_operand.vmem [shape: f32[16,2], index: 13, kind: input, shape index: {}]
  %s14 = inlined_call_operand.vmem [shape: bf16[64,16], index: 14, kind: input, shape index: {}]
  %s15 = inlined_call_operand.vmem [shape: f32[64,1], index: 15, kind: input, shape index: {}]
  %s16 = inlined_call_operand.vmem [shape: bf16[64,16], index: 16, kind: input, shape index: {}]
  %s17 = inlined_call_operand.vmem [shape: f32[64,1], index: 17, kind: input, shape index: {}]
  %s18 = inlined_call_operand.vmem [shape: f32[2,64,256], index: 18, kind: output, shape index: {}]
  %s19 = sld [smem:[#allocation0]]
  $region105: #{_lambda_.1} parent=0
    _
  %s21 = ssub.s32 1, %s19
  %s22 = scalar_select 0, %s21, %s19
  loop: start=0, step=1, limit=4
  $region2: #{_lambda_.1} parent=0 // loop_pre_header
    _
  $region3: #{_lambda_.1} parent=0 // loop_header
    %s24 = sphi 0, %s28
    %p25 = scmp.ge.s32.totalorder %s24, 4
    %s34 = sphi 0, %s36
    %s37 = sphi 0, %s34
    %s38 = sphi 0, %s37
    %s54 = sphi 0, %s38
    %s58 = sphi 0, %s58
    %s60 = sphi 0, %s58
    %s61 = sphi 0, %s60
    %s75 = sphi 0, %s61
    %s79 = sphi 0, %s79
    %s81 = sphi 0, %s79
    %s82 = sphi 0, %s81
    %s96 = sphi 0, %s82
    %s100 = sphi 0, %s100
    %s102 = sphi 0, %s100
    %s103 = sphi 0, %s102
    %s117 = sphi 0, %s103
    %s121 = sphi 0, %s121
    %s123 = sphi 0, %s121
    %s124 = sphi 0, %s123
    %s138 = sphi 0, %s124
    %s142 = sphi 0, %s142
    %s144 = sphi 0, %s142
    %s145 = sphi 0, %s144
    %s159 = sphi 0, %s145
    %s163 = sphi 0, %s163
    %s165 = sphi 0, %s163
    %s166 = sphi 0, %s165
    %s180 = sphi 0, %s166
    %s184 = sphi 0, %s184
    %s186 = sphi 0, %s184
    %s187 = sphi 0, %s186
    %s201 = sphi 0, %s187
    %s205 = sphi 0, %s205
    %s207 = sphi 0, %s205
    %s208 = sphi 0, %s207
    %s222 = sphi 0, %s208
    %s226 = sphi 0, %s226
    %s228 = sphi 0, %s226
    %s229 = sphi 0, %s228
    %s243 = sphi 0, %s229
    %s247 = sphi 0, %s247
    %s249 = sphi 0, %s247
    %s250 = sphi 0, %s249
    %s264 = sphi 0, %s250
    %s268 = sphi 0, %s268
    %s270 = sphi 0, %s268
    %s271 = sphi 0, %s270
    %s285 = sphi 0, %s271
    %s289 = sphi 0, %s289
    %s291 = sphi 0, %s289
    %s292 = sphi 0, %s291
    %s306 = sphi 0, %s292
    %s310 = sphi 0, %s310
    %s312 = sphi 0, %s310
    %s313 = sphi 0, %s312
    %s327 = sphi 0, %s313
    %s331 = sphi 0, %s331
    %s333 = sphi 0, %s331
    %s334 = sphi 0, %s333
    %s348 = sphi 0, %s334
    %s352 = sphi 0, %s352
    %s354 = sphi 0, %s352
    %s355 = sphi 0, %s354
    %s369 = sphi 0, %s355
    %s373 = sphi 0, %s373
    %s375 = sphi 0, %s373
    %s376 = sphi 0, %s375
    %s390 = sphi 0, %s376
    %s394 = sphi 0, %s394
    %s396 = sphi 0, %s394
    %s397 = sphi 0, %s396
    %s411 = sphi 0, %s397
    %s417 = sphi 0, %s419
    %s420 = sphi 0, %s417
    %s421 = sphi 0, %s420
    %s437 = sphi 0, %s421
  $region4: #{_lambda_.1} parent=0 // loop_header_branch
    %27 = sbr.rel (%p25) target = $region8
  $region5: #{_lambda_.1} parent=0 // loop_body
    %s29 = ssub.s32 %s24, 1
    %s30 = ssub.s32 %s24, 2
    %s31 = sadd.s32 %s24, 1
    %s32 = ssub.s32 %s24, %s31
    %p33 = scmp.eq.s32.totalorder %s32, 0
    %s35 = sadd.s32 %s34, 1
    %s36 = scalar_select %p33, %s34, %s35
    %p39 = pneg %p33
    %p40 = scmp.eq.s32.totalorder %s24, 1
    %p41 = por %p39, %p40
    %p42 = scmp.ne.s32.totalorder %s34, %s37
    %p43 = scmp.eq.s32.totalorder %s24, 0
    %p44 = por %p42, %p43
    %p45 = scmp.ne.s32.totalorder %s34, %s37
    %p46 = scmp.eq.s32.totalorder %s29, 1
    %p47 = por %p45, %p46
    %p48 = scmp.ne.s32.totalorder %s37, %s38
    %p49 = scmp.eq.s32.totalorder %s29, 0
    %p50 = por %p48, %p49
    %p51 = scmp.ne.s32.totalorder %s37, %s38
    %p52 = scmp.eq.s32.totalorder %s30, 1
    %p53 = por %p51, %p52
    %p55 = scmp.ne.s32.totalorder %s38, %s54
    %p56 = scmp.eq.s32.totalorder %s30, 0
    %p57 = por %p55, %p56
    %s59 = sadd.s32 %s58, 1
    %p62 = scmp.eq.s32.totalorder %s24, 1
    %p63 = scmp.ne.s32.totalorder %s58, %s60
    %p64 = scmp.eq.s32.totalorder %s24, 0
    %p65 = por %p63, %p64
    %p66 = scmp.ne.s32.totalorder %s58, %s60
    %p67 = scmp.eq.s32.totalorder %s29, 1
    %p68 = por %p66, %p67
    %p69 = scmp.ne.s32.totalorder %s60, %s61
    %p70 = scmp.eq.s32.totalorder %s29, 0
    %p71 = por %p69, %p70
    %p72 = scmp.ne.s32.totalorder %s60, %s61
    %p73 = scmp.eq.s32.totalorder %s30, 1
    %p74 = por %p72, %p73
    %p76 = scmp.ne.s32.totalorder %s61, %s75
    %p77 = scmp.eq.s32.totalorder %s30, 0
    %p78 = por %p76, %p77
    %s80 = sadd.s32 %s79, 1
    %p83 = scmp.eq.s32.totalorder %s24, 1
    %p84 = scmp.ne.s32.totalorder %s79, %s81
    %p85 = scmp.eq.s32.totalorder %s24, 0
    %p86 = por %p84, %p85
    %p87 = scmp.ne.s32.totalorder %s79, %s81
    %p88 = scmp.eq.s32.totalorder %s29, 1
    %p89 = por %p87, %p88
    %p90 = scmp.ne.s32.totalorder %s81, %s82
    %p91 = scmp.eq.s32.totalorder %s29, 0
    %p92 = por %p90, %p91
    %p93 = scmp.ne.s32.totalorder %s81, %s82
    %p94 = scmp.eq.s32.totalorder %s30, 1
    %p95 = por %p93, %p94
    %p97 = scmp.ne.s32.totalorder %s82, %s96
    %p98 = scmp.eq.s32.totalorder %s30, 0
    %p99 = por %p97, %p98
    %s101 = sadd.s32 %s100, 1
    %p104 = scmp.eq.s32.totalorder %s24, 1
    %p105 = scmp.ne.s32.totalorder %s100, %s102
    %p106 = scmp.eq.s32.totalorder %s24, 0
    %p107 = por %p105, %p106
    %p108 = scmp.ne.s32.totalorder %s100, %s102
    %p109 = scmp.eq.s32.totalorder %s29, 1
    %p110 = por %p108, %p109
    %p111 = scmp.ne.s32.totalorder %s102, %s103
    %p112 = scmp.eq.s32.totalorder %s29, 0
    %p113 = por %p111, %p112
    %p114 = scmp.ne.s32.totalorder %s102, %s103
    %p115 = scmp.eq.s32.totalorder %s30, 1
    %p116 = por %p114, %p115
    %p118 = scmp.ne.s32.totalorder %s103, %s117
    %p119 = scmp.eq.s32.totalorder %s30, 0
    %p120 = por %p118, %p119
    %s122 = sadd.s32 %s121, 1
    %p125 = scmp.eq.s32.totalorder %s24, 1
    %p126 = scmp.ne.s32.totalorder %s121, %s123
    %p127 = scmp.eq.s32.totalorder %s24, 0
    %p128 = por %p126, %p127
    %p129 = scmp.ne.s32.totalorder %s121, %s123
    %p130 = scmp.eq.s32.totalorder %s29, 1
    %p131 = por %p129, %p130
    %p132 = scmp.ne.s32.totalorder %s123, %s124
    %p133 = scmp.eq.s32.totalorder %s29, 0
    %p134 = por %p132, %p133
    %p135 = scmp.ne.s32.totalorder %s123, %s124
    %p136 = scmp.eq.s32.totalorder %s30, 1
    %p137 = por %p135, %p136
    %p139 = scmp.ne.s32.totalorder %s124, %s138
    %p140 = scmp.eq.s32.totalorder %s30, 0
    %p141 = por %p139, %p140
    %s143 = sadd.s32 %s142, 1
    %p146 = scmp.eq.s32.totalorder %s24, 1
    %p147 = scmp.ne.s32.totalorder %s142, %s144
    %p148 = scmp.eq.s32.totalorder %s24, 0
    %p149 = por %p147, %p148
    %p150 = scmp.ne.s32.totalorder %s142, %s144
    %p151 = scmp.eq.s32.totalorder %s29, 1
    %p152 = por %p150, %p151
    %p153 = scmp.ne.s32.totalorder %s144, %s145
    %p154 = scmp.eq.s32.totalorder %s29, 0
    %p155 = por %p153, %p154
    %p156 = scmp.ne.s32.totalorder %s144, %s145
    %p157 = scmp.eq.s32.totalorder %s30, 1
    %p158 = por %p156, %p157
    %p160 = scmp.ne.s32.totalorder %s145, %s159
    %p161 = scmp.eq.s32.totalorder %s30, 0
    %p162 = por %p160, %p161
    %s164 = sadd.s32 %s163, 1
    %p167 = scmp.eq.s32.totalorder %s24, 1
    %p168 = scmp.ne.s32.totalorder %s163, %s165
    %p169 = scmp.eq.s32.totalorder %s24, 0
    %p170 = por %p168, %p169
    %p171 = scmp.ne.s32.totalorder %s163, %s165
    %p172 = scmp.eq.s32.totalorder %s29, 1
    %p173 = por %p171, %p172
    %p174 = scmp.ne.s32.totalorder %s165, %s166
    %p175 = scmp.eq.s32.totalorder %s29, 0
    %p176 = por %p174, %p175
    %p177 = scmp.ne.s32.totalorder %s165, %s166
    %p178 = scmp.eq.s32.totalorder %s30, 1
    %p179 = por %p177, %p178
    %p181 = scmp.ne.s32.totalorder %s166, %s180
    %p182 = scmp.eq.s32.totalorder %s30, 0
    %p183 = por %p181, %p182
    %s185 = sadd.s32 %s184, 1
    %p188 = scmp.eq.s32.totalorder %s24, 1
    %p189 = scmp.ne.s32.totalorder %s184, %s186
    %p190 = scmp.eq.s32.totalorder %s24, 0
    %p191 = por %p189, %p190
    %p192 = scmp.ne.s32.totalorder %s184, %s186
    %p193 = scmp.eq.s32.totalorder %s29, 1
    %p194 = por %p192, %p193
    %p195 = scmp.ne.s32.totalorder %s186, %s187
    %p196 = scmp.eq.s32.totalorder %s29, 0
    %p197 = por %p195, %p196
    %p198 = scmp.ne.s32.totalorder %s186, %s187
    %p199 = scmp.eq.s32.totalorder %s30, 1
    %p200 = por %p198, %p199
    %p202 = scmp.ne.s32.totalorder %s187, %s201
    %p203 = scmp.eq.s32.totalorder %s30, 0
    %p204 = por %p202, %p203
    %s206 = sadd.s32 %s205, 1
    %p209 = scmp.eq.s32.totalorder %s24, 1
    %p210 = scmp.ne.s32.totalorder %s205, %s207
    %p211 = scmp.eq.s32.totalorder %s24, 0
    %p212 = por %p210, %p211
    %p213 = scmp.ne.s32.totalorder %s205, %s207
    %p214 = scmp.eq.s32.totalorder %s29, 1
    %p215 = por %p213, %p214
    %p216 = scmp.ne.s32.totalorder %s207, %s208
    %p217 = scmp.eq.s32.totalorder %s29, 0
    %p218 = por %p216, %p217
    %p219 = scmp.ne.s32.totalorder %s207, %s208
    %p220 = scmp.eq.s32.totalorder %s30, 1
    %p221 = por %p219, %p220
    %p223 = scmp.ne.s32.totalorder %s208, %s222
    %p224 = scmp.eq.s32.totalorder %s30, 0
    %p225 = por %p223, %p224
    %s227 = sadd.s32 %s226, 1
    %p230 = scmp.eq.s32.totalorder %s24, 1
    %p231 = scmp.ne.s32.totalorder %s226, %s228
    %p232 = scmp.eq.s32.totalorder %s24, 0
    %p233 = por %p231, %p232
    %p234 = scmp.ne.s32.totalorder %s226, %s228
    %p235 = scmp.eq.s32.totalorder %s29, 1
    %p236 = por %p234, %p235
    %p237 = scmp.ne.s32.totalorder %s228, %s229
    %p238 = scmp.eq.s32.totalorder %s29, 0
    %p239 = por %p237, %p238
    %p240 = scmp.ne.s32.totalorder %s228, %s229
    %p241 = scmp.eq.s32.totalorder %s30, 1
    %p242 = por %p240, %p241
    %p244 = scmp.ne.s32.totalorder %s229, %s243
    %p245 = scmp.eq.s32.totalorder %s30, 0
    %p246 = por %p244, %p245
    %s248 = sadd.s32 %s247, 1
    %p251 = scmp.eq.s32.totalorder %s24, 1
    %p252 = scmp.ne.s32.totalorder %s247, %s249
    %p253 = scmp.eq.s32.totalorder %s24, 0
    %p254 = por %p252, %p253
    %p255 = scmp.ne.s32.totalorder %s247, %s249
    %p256 = scmp.eq.s32.totalorder %s29, 1
    %p257 = por %p255, %p256
    %p258 = scmp.ne.s32.totalorder %s249, %s250
    %p259 = scmp.eq.s32.totalorder %s29, 0
    %p260 = por %p258, %p259
    %p261 = scmp.ne.s32.totalorder %s249, %s250
    %p262 = scmp.eq.s32.totalorder %s30, 1
    %p263 = por %p261, %p262
    %p265 = scmp.ne.s32.totalorder %s250, %s264
    %p266 = scmp.eq.s32.totalorder %s30, 0
    %p267 = por %p265, %p266
    %s269 = sadd.s32 %s268, 1
    %p272 = scmp.eq.s32.totalorder %s24, 1
    %p273 = scmp.ne.s32.totalorder %s268, %s270
    %p274 = scmp.eq.s32.totalorder %s24, 0
    %p275 = por %p273, %p274
    %p276 = scmp.ne.s32.totalorder %s268, %s270
    %p277 = scmp.eq.s32.totalorder %s29, 1
    %p278 = por %p276, %p277
    %p279 = scmp.ne.s32.totalorder %s270, %s271
    %p280 = scmp.eq.s32.totalorder %s29, 0
    %p281 = por %p279, %p280
    %p282 = scmp.ne.s32.totalorder %s270, %s271
    %p283 = scmp.eq.s32.totalorder %s30, 1
    %p284 = por %p282, %p283
    %p286 = scmp.ne.s32.totalorder %s271, %s285
    %p287 = scmp.eq.s32.totalorder %s30, 0
    %p288 = por %p286, %p287
    %s290 = sadd.s32 %s289, 1
    %p293 = scmp.eq.s32.totalorder %s24, 1
    %p294 = scmp.ne.s32.totalorder %s289, %s291
    %p295 = scmp.eq.s32.totalorder %s24, 0
    %p296 = por %p294, %p295
    %p297 = scmp.ne.s32.totalorder %s289, %s291
    %p298 = scmp.eq.s32.totalorder %s29, 1
    %p299 = por %p297, %p298
    %p300 = scmp.ne.s32.totalorder %s291, %s292
    %p301 = scmp.eq.s32.totalorder %s29, 0
    %p302 = por %p300, %p301
    %p303 = scmp.ne.s32.totalorder %s291, %s292
    %p304 = scmp.eq.s32.totalorder %s30, 1
    %p305 = por %p303, %p304
    %p307 = scmp.ne.s32.totalorder %s292, %s306
    %p308 = scmp.eq.s32.totalorder %s30, 0
    %p309 = por %p307, %p308
    %s311 = sadd.s32 %s310, 1
    %p314 = scmp.eq.s32.totalorder %s24, 1
    %p315 = scmp.ne.s32.totalorder %s310, %s312
    %p316 = scmp.eq.s32.totalorder %s24, 0
    %p317 = por %p315, %p316
    %p318 = scmp.ne.s32.totalorder %s310, %s312
    %p319 = scmp.eq.s32.totalorder %s29, 1
    %p320 = por %p318, %p319
    %p321 = scmp.ne.s32.totalorder %s312, %s313
    %p322 = scmp.eq.s32.totalorder %s29, 0
    %p323 = por %p321, %p322
    %p324 = scmp.ne.s32.totalorder %s312, %s313
    %p325 = scmp.eq.s32.totalorder %s30, 1
    %p326 = por %p324, %p325
    %p328 = scmp.ne.s32.totalorder %s313, %s327
    %p329 = scmp.eq.s32.totalorder %s30, 0
    %p330 = por %p328, %p329
    %s332 = sadd.s32 %s331, 1
    %p335 = scmp.eq.s32.totalorder %s24, 1
    %p336 = scmp.ne.s32.totalorder %s331, %s333
    %p337 = scmp.eq.s32.totalorder %s24, 0
    %p338 = por %p336, %p337
    %p339 = scmp.ne.s32.totalorder %s331, %s333
    %p340 = scmp.eq.s32.totalorder %s29, 1
    %p341 = por %p339, %p340
    %p342 = scmp.ne.s32.totalorder %s333, %s334
    %p343 = scmp.eq.s32.totalorder %s29, 0
    %p344 = por %p342, %p343
    %p345 = scmp.ne.s32.totalorder %s333, %s334
    %p346 = scmp.eq.s32.totalorder %s30, 1
    %p347 = por %p345, %p346
    %p349 = scmp.ne.s32.totalorder %s334, %s348
    %p350 = scmp.eq.s32.totalorder %s30, 0
    %p351 = por %p349, %p350
    %s353 = sadd.s32 %s352, 1
    %p356 = scmp.eq.s32.totalorder %s24, 1
    %p357 = scmp.ne.s32.totalorder %s352, %s354
    %p358 = scmp.eq.s32.totalorder %s24, 0
    %p359 = por %p357, %p358
    %p360 = scmp.ne.s32.totalorder %s352, %s354
    %p361 = scmp.eq.s32.totalorder %s29, 1
    %p362 = por %p360, %p361
    %p363 = scmp.ne.s32.totalorder %s354, %s355
    %p364 = scmp.eq.s32.totalorder %s29, 0
    %p365 = por %p363, %p364
    %p366 = scmp.ne.s32.totalorder %s354, %s355
    %p367 = scmp.eq.s32.totalorder %s30, 1
    %p368 = por %p366, %p367
    %p370 = scmp.ne.s32.totalorder %s355, %s369
    %p371 = scmp.eq.s32.totalorder %s30, 0
    %p372 = por %p370, %p371
    %s374 = sadd.s32 %s373, 1
    %p377 = scmp.eq.s32.totalorder %s24, 1
    %p378 = scmp.ne.s32.totalorder %s373, %s375
    %p379 = scmp.eq.s32.totalorder %s24, 0
    %p380 = por %p378, %p379
    %p381 = scmp.ne.s32.totalorder %s373, %s375
    %p382 = scmp.eq.s32.totalorder %s29, 1
    %p383 = por %p381, %p382
    %p384 = scmp.ne.s32.totalorder %s375, %s376
    %p385 = scmp.eq.s32.totalorder %s29, 0
    %p386 = por %p384, %p385
    %p387 = scmp.ne.s32.totalorder %s375, %s376
    %p388 = scmp.eq.s32.totalorder %s30, 1
    %p389 = por %p387, %p388
    %p391 = scmp.ne.s32.totalorder %s376, %s390
    %p392 = scmp.eq.s32.totalorder %s30, 0
    %p393 = por %p391, %p392
    %s395 = sadd.s32 %s394, 1
    %p398 = scmp.eq.s32.totalorder %s24, 1
    %p399 = scmp.ne.s32.totalorder %s394, %s396
    %p400 = scmp.eq.s32.totalorder %s24, 0
    %p401 = por %p399, %p400
    %p402 = scmp.ne.s32.totalorder %s394, %s396
    %p403 = scmp.eq.s32.totalorder %s29, 1
    %p404 = por %p402, %p403
    %p405 = scmp.ne.s32.totalorder %s396, %s397
    %p406 = scmp.eq.s32.totalorder %s29, 0
    %p407 = por %p405, %p406
    %p408 = scmp.ne.s32.totalorder %s396, %s397
    %p409 = scmp.eq.s32.totalorder %s30, 1
    %p410 = por %p408, %p409
    %p412 = scmp.ne.s32.totalorder %s397, %s411
    %p413 = scmp.eq.s32.totalorder %s30, 0
    %p414 = por %p412, %p413
    %s415 = ssub.s32 %s24, %s31
    %p416 = scmp.eq.s32.totalorder %s415, 0
    %s418 = sadd.s32 %s417, 1
    %s419 = scalar_select %p416, %s417, %s418
    %p422 = pneg %p416
    %p423 = scmp.eq.s32.totalorder %s24, 1
    %p424 = por %p422, %p423
    %p425 = scmp.ne.s32.totalorder %s417, %s420
    %p426 = scmp.eq.s32.totalorder %s24, 0
    %p427 = por %p425, %p426
    %p428 = scmp.ne.s32.totalorder %s417, %s420
    %p429 = scmp.eq.s32.totalorder %s29, 1
    %p430 = por %p428, %p429
    %p431 = scmp.ne.s32.totalorder %s420, %s421
    %p432 = scmp.eq.s32.totalorder %s29, 0
    %p433 = por %p431, %p432
    %p434 = scmp.ne.s32.totalorder %s420, %s421
    %p435 = scmp.eq.s32.totalorder %s30, 1
    %p436 = por %p434, %p435
    %p438 = scmp.ne.s32.totalorder %s421, %s437
    %p439 = scmp.eq.s32.totalorder %s30, 0
    %p440 = por %p438, %p439
    %p441 = scmp.le.s32.totalorder 1, %s24
    %p442 = scmp.lt.s32.totalorder %s24, 3
    %p443 = pnand %p441, %p442
    %p444 = pneg %p443
    // Predicated region
    $region9: #{_lambda_.1} parent=5 // pred_check
      _
    $region10: #{_lambda_.1} parent=5 // pred_check_branch
      %446 = sbr.rel (%p443) target = $region12
    $region11: #{_lambda_.1} parent=5 // pred_region
      %s447 = ssub.s32 %s24, 1
      // Predicated region
      $region13: #{_lambda_.1} parent=11 // pred_check
        %p448 = pneg %p71
      $region14: #{_lambda_.1} parent=11 // pred_check_branch
        %450 = sbr.rel (%p448) target = $region16
      $region15: #{_lambda_.1} parent=11 // pred_region
        _
      $region16: #{_lambda_.1} parent=11 // pred_fallthru
        _
      // Predicated region
      $region17: #{_lambda_.1} parent=11 // pred_check
        %p451 = pneg %p92
      $region18: #{_lambda_.1} parent=11 // pred_check_branch
        %453 = sbr.rel (%p451) target = $region20
      $region19: #{_lambda_.1} parent=11 // pred_region
        _
      $region20: #{_lambda_.1} parent=11 // pred_fallthru
        _
      // Predicated region
      $region21: #{_lambda_.1} parent=11 // pred_check
        %p454 = pneg %p113
      $region22: #{_lambda_.1} parent=11 // pred_check_branch
        %456 = sbr.rel (%p454) target = $region24
      $region23: #{_lambda_.1} parent=11 // pred_region
        _
      $region24: #{_lambda_.1} parent=11 // pred_fallthru
        _
      // Predicated region
      $region25: #{_lambda_.1} parent=11 // pred_check
        %p457 = pneg %p134
      $region26: #{_lambda_.1} parent=11 // pred_check_branch
        %459 = sbr.rel (%p457) target = $region28
      $region27: #{_lambda_.1} parent=11 // pred_region
        _
      $region28: #{_lambda_.1} parent=11 // pred_fallthru
        _
      // Predicated region
      $region29: #{_lambda_.1} parent=11 // pred_check
        %p460 = pneg %p155
      $region30: #{_lambda_.1} parent=11 // pred_check_branch
        %462 = sbr.rel (%p460) target = $region32
      $region31: #{_lambda_.1} parent=11 // pred_region
        _
      $region32: #{_lambda_.1} parent=11 // pred_fallthru
        _
      // Predicated region
      $region33: #{_lambda_.1} parent=11 // pred_check
        %p463 = pneg %p176
      $region34: #{_lambda_.1} parent=11 // pred_check_branch
        %465 = sbr.rel (%p463) target = $region36
      $region35: #{_lambda_.1} parent=11 // pred_region
        _
      $region36: #{_lambda_.1} parent=11 // pred_fallthru
        _
      // Predicated region
      $region37: #{_lambda_.1} parent=11 // pred_check
        %p466 = pneg %p197
      $region38: #{_lambda_.1} parent=11 // pred_check_branch
        %468 = sbr.rel (%p466) target = $region40
      $region39: #{_lambda_.1} parent=11 // pred_region
        _
      $region40: #{_lambda_.1} parent=11 // pred_fallthru
        _
      // Predicated region
      $region41: #{_lambda_.1} parent=11 // pred_check
        %p469 = pneg %p218
      $region42: #{_lambda_.1} parent=11 // pred_check_branch
        %471 = sbr.rel (%p469) target = $region44
      $region43: #{_lambda_.1} parent=11 // pred_region
        _
      $region44: #{_lambda_.1} parent=11 // pred_fallthru
        _
      // Predicated region
      $region45: #{_lambda_.1} parent=11 // pred_check
        %p472 = pneg %p239
      $region46: #{_lambda_.1} parent=11 // pred_check_branch
        %474 = sbr.rel (%p472) target = $region48
      $region47: #{_lambda_.1} parent=11 // pred_region
        _
      $region48: #{_lambda_.1} parent=11 // pred_fallthru
        _
      // Predicated region
      $region49: #{_lambda_.1} parent=11 // pred_check
        %p475 = pneg %p260
      $region50: #{_lambda_.1} parent=11 // pred_check_branch
        %477 = sbr.rel (%p475) target = $region52
      $region51: #{_lambda_.1} parent=11 // pred_region
        _
      $region52: #{_lambda_.1} parent=11 // pred_fallthru
        _
      // Predicated region
      $region53: #{_lambda_.1} parent=11 // pred_check
        %p478 = pneg %p281
      $region54: #{_lambda_.1} parent=11 // pred_check_branch
        %480 = sbr.rel (%p478) target = $region56
      $region55: #{_lambda_.1} parent=11 // pred_region
        _
      $region56: #{_lambda_.1} parent=11 // pred_fallthru
        _
      // Predicated region
      $region57: #{_lambda_.1} parent=11 // pred_check
        %p481 = pneg %p302
      $region58: #{_lambda_.1} parent=11 // pred_check_branch
        %483 = sbr.rel (%p481) target = $region60
      $region59: #{_lambda_.1} parent=11 // pred_region
        _
      $region60: #{_lambda_.1} parent=11 // pred_fallthru
        _
      // Predicated region
      $region61: #{_lambda_.1} parent=11 // pred_check
        %p484 = pneg %p323
      $region62: #{_lambda_.1} parent=11 // pred_check_branch
        %486 = sbr.rel (%p484) target = $region64
      $region63: #{_lambda_.1} parent=11 // pred_region
        _
      $region64: #{_lambda_.1} parent=11 // pred_fallthru
        _
      // Predicated region
      $region65: #{_lambda_.1} parent=11 // pred_check
        %p487 = pneg %p344
      $region66: #{_lambda_.1} parent=11 // pred_check_branch
        %489 = sbr.rel (%p487) target = $region68
      $region67: #{_lambda_.1} parent=11 // pred_region
        _
      $region68: #{_lambda_.1} parent=11 // pred_fallthru
        _
      // Predicated region
      $region69: #{_lambda_.1} parent=11 // pred_check
        %p490 = pneg %p365
      $region70: #{_lambda_.1} parent=11 // pred_check_branch
        %492 = sbr.rel (%p490) target = $region72
      $region71: #{_lambda_.1} parent=11 // pred_region
        _
      $region72: #{_lambda_.1} parent=11 // pred_fallthru
        _
      // Predicated region
      $region73: #{_lambda_.1} parent=11 // pred_check
        %p493 = pneg %p386
      $region74: #{_lambda_.1} parent=11 // pred_check_branch
        %495 = sbr.rel (%p493) target = $region76
      $region75: #{_lambda_.1} parent=11 // pred_region
        _
      $region76: #{_lambda_.1} parent=11 // pred_fallthru
        _
      // Predicated region
      $region77: #{_lambda_.1} parent=11 // pred_check
        %p496 = pneg %p407
      $region78: #{_lambda_.1} parent=11 // pred_check_branch
        %498 = sbr.rel (%p496) target = $region80
      $region79: #{_lambda_.1} parent=11 // pred_region
        _
      $region80: #{_lambda_.1} parent=11 // pred_fallthru
        _
    $region12: #{_lambda_.1} parent=5 // pred_fallthru
      _
    %p499 = scmp.lt.s32.totalorder %s24, 2
    // Predicated region
    $region81: #{_lambda_.1} parent=5 // pred_check
      %p500 = pneg %p499
    $region82: #{_lambda_.1} parent=5 // pred_check_branch
      %502 = sbr.rel (%p500) target = $region84
    $region83: #{_lambda_.1} parent=5 // pred_region
      // Predicated region
      $region85: #{_lambda_.1} parent=83 // pred_check
        %p503 = pneg %p44
      $region86: #{_lambda_.1} parent=83 // pred_check_branch
        %505 = sbr.rel (%p503) target = $region88
      $region87: #{_lambda_.1} parent=83 // pred_region
        %p506 = scmp.lt.s32.totalorder %s24, 1
        %s507 = scalar_select %p506, %s24, 1
        %s508 = smul.addr %s507, 4
        %s509 = smul.addr %s508, 8
        %s510 = scalar_lea.vmem %s0, %s509
      $region88: #{_lambda_.1} parent=83 // pred_fallthru
        _
    $region84: #{_lambda_.1} parent=5 // pred_fallthru
      _
    %p511 = scmp.le.s32.totalorder 1, %s24
    %p512 = scmp.lt.s32.totalorder %s24, 3
    %p513 = pnand %p511, %p512
    %p514 = pneg %p513
    // Predicated region
    $region89: #{_lambda_.1} parent=5 // pred_check
      _
    $region90: #{_lambda_.1} parent=5 // pred_check_branch
      %516 = sbr.rel (%p513) target = $region92
    $region91: #{_lambda_.1} parent=5 // pred_region
      %s517 = ssub.s32 %s24, 1
      %p518 = scmp.lt.s32.totalorder %s29, 1
      %s519 = scalar_select %p518, %s29, 1
      %s520 = smul.addr %s519, 4
      %s521 = smul.addr %s520, 8
      %s522 = scalar_lea.vmem %s0, %s521
      %p523 = pneg %p50
      %p524 = pneg %p47
      %p525 = pneg %p71
      %p526 = pneg %p68
      %p527 = pneg %p92
      %p528 = pneg %p89
      %p529 = pneg %p113
      %p530 = pneg %p110
      %p531 = pneg %p134
      %p532 = pneg %p131
      %p533 = pneg %p155
      %p534 = pneg %p152
      %p535 = pneg %p176
      %p536 = pneg %p173
      %p537 = pneg %p197
      %p538 = pneg %p194
      %p539 = pneg %p218
      %p540 = pneg %p215
      %p541 = pneg %p239
      %p542 = pneg %p236
      %p543 = pneg %p260
      %p544 = pneg %p257
      %p545 = pneg %p281
      %p546 = pneg %p278
      %p547 = pneg %p302
      %p548 = pneg %p299
      %p549 = pneg %p323
      %p550 = pneg %p320
      %p551 = pneg %p344
      %p552 = pneg %p341
      %p553 = pneg %p365
      %p554 = pneg %p362
      %p555 = pneg %p386
      %p556 = pneg %p383
      %p557 = pneg %p407
      %p558 = pneg %p404
      %p559 = pneg %p433
      %p560 = pneg %p430
      %p561 = scmp.lt.s32.totalorder %s29, 1
      %s562 = scalar_select %p561, %s29, 1
      %s563 = smul.addr %s562, 16
      %s564 = smul.addr %s563, 8
      %s565 = scalar_lea.vmem %s18, %s564
      %p566 = scmp.lt.s32.totalorder %s29, 1
      %s567 = scalar_select %p566, %s29, 1
      %s568 = smul.addr %s567, 4
      %s569 = smul.addr %s568, 8
      %s570 = scalar_lea.vmem %s0, %s569
      %p571 = scmp.lt.s32.totalorder %s29, 1
      %s572 = scalar_select %p571, %s29, 1
      %s573 = smul.addr %s572, 16
      %s574 = smul.addr %s573, 8
      %s575 = scalar_lea.vmem %s18, %s574
      %v577 = vld [vmem:[%s570] sm:$0xff]
      %v578 = vld [vmem:[%s570 + $0x8] sm:$0xff]
      %v579 = vld [vmem:[%s570 + $0x10] sm:$0xff]
      %v580 = vld [vmem:[%s570 + $0x18] sm:$0xff]
      %v581 = vpack.c.bf16 %v579, %v577
      %v582 = vpack.c.bf16 %v580, %v578
      %v583 = vld [vmem:[%s1] sm:$0xf]
      %v584 = vld [vmem:[%s1 + $0x4] sm:$0xf]
      %v585 = vld [vmem:[%s2] sm:$0xff]
      %v586 = vld [vmem:[%s2 + $0x8] sm:$0xff]
      %588 = vset.pattern.permute.xlu0 0
      %589 = vperm.xlu0 %588, %v585
      %v590 = vpop.permute.xlu0 %589
      %593 = vset.pattern.permute.xlu0 0
      %594 = vperm.xlu0 %593, %v586
      %v595 = vpop.permute.xlu0 %594
      %v599 = vunpack.c.l.b16 %v583
      %v600 = vunpack.c.l.b16 %v584
      %v601 = vpack.c.b16 %v600, %v599
      %vm602 = vcmask 130048
      %v604 = vsel %vm602, %v601, 0
      %606 = vmatprep.subr.bf16.mxu0 %v582
      %607 = vmatpush1.bf16.msra.mxu0 %v581
      %608 = vmatprep.subr.bf16.mxu0 0
      %609 = vmatpush1.bf16.msra.mxu0 0
      %610 = vmatprep.subr.bf16.mxu0 0
      %611 = vmatpush1.bf16.msra.mxu0 0
      %612 = vmatprep.subr.bf16.mxu0 0
      %613 = vmatpush1.bf16.msra.mxu0 0
      %614 = vmatprep.subr.bf16.mxu0 0
      %615 = vmatpush1.bf16.msra.mxu0 0
      %616 = vmatprep.subr.bf16.mxu0 0
      %617 = vmatpush1.bf16.msra.mxu0 0
      %618 = vmatprep.subr.bf16.mxu0 0
      %619 = vmatpush1.bf16.msra.mxu0 0
      %620 = vmatprep.subr.bf16.mxu0 0
      %621 = vmatpush1.bf16.msra.mxu0 0
      %622 = vmatprep.subr.bf16.mxu0 0
      %623 = vmatpush1.bf16.msra.mxu0 0
      %624 = vmatprep.subr.bf16.mxu0 0
      %625 = vmatpush1.bf16.msra.mxu0 0
      %626 = vmatprep.subr.bf16.mxu0 0
      %627 = vmatpush1.bf16.msra.mxu0 0
      %628 = vmatprep.subr.bf16.mxu0 0
      %629 = vmatpush1.bf16.msra.mxu0 0
      %630 = vmatprep.subr.bf16.mxu0 0
      %631 = vmatpush1.bf16.msra.mxu0 0
      %632 = vmatprep.subr.bf16.mxu0 0
      %633 = vmatpush1.bf16.msra.mxu0 0
      %634 = vmatprep.subr.bf16.mxu0 0
      %635 = vmatpush1.bf16.msra.mxu0 0
      %636 = vmatprep.subr.bf16.mxu0 0
      %637 = vmatpush1.bf16.msra.mxu0 0
      %638 = vmatprep.mubr.bf16.mxu0 0
      %639 = vmatmul.mubr.bf16.gmra.mrb[0].mxu0 %v604
      %v640 = vpop.f32.mrb[0].mxu0
      %v641 = vadd.f32 %v590, %v640
      %v642 = vpop.f32.mrb[0].mxu0
      %v643 = vadd.f32 %v590, %v642
      %v644 = vpop.f32.mrb[0].mxu0
      %v645 = vadd.f32 %v595, %v644
      %v646 = vpop.f32.mrb[0].mxu0
      %v647 = vadd.f32 %v595, %v646
      %648 = vdwg.mxu0
      %v649 = vmax.f32 %v641, 0.0
      %v650 = vmax.f32 %v643, 0.0
      %v651 = vmax.f32 %v645, 0.0
      %v652 = vmax.f32 %v647, 0.0
      %v653 = vpack.c.bf16 %v649, %v649
      %v654 = vpack.c.bf16 %v650, %v650
      %v655 = vld [vmem:[%s4] sm:$0xf]
      %vm656 = vcmask 64512
      %v658 = vsel %vm656, %v655, 0
      %vm660 = vcmask 1043456
      %v662 = vsel %vm660, %v653, 0
      %v665 = vsel %vm660, %v654, 0
      %667 = vmatprep.subr.bf16.mxu0 %v665
      %668 = vmatpush1.bf16.msra.mxu0 %v662
      %669 = vmatprep.subr.bf16.mxu0 0
      %670 = vmatpush1.bf16.msra.mxu0 0
      %671 = vmatprep.subr.bf16.mxu0 0
      %672 = vmatpush1.bf16.msra.mxu0 0
      %673 = vmatprep.subr.bf16.mxu0 0
      %674 = vmatpush1.bf16.msra.mxu0 0
      %675 = vmatprep.subr.bf16.mxu0 0
      %676 = vmatpush1.bf16.msra.mxu0 0
      %677 = vmatprep.subr.bf16.mxu0 0
      %678 = vmatpush1.bf16.msra.mxu0 0
      %679 = vmatprep.subr.bf16.mxu0 0
      %680 = vmatpush1.bf16.msra.mxu0 0
      %681 = vmatprep.subr.bf16.mxu0 0
      %682 = vmatpush1.bf16.msra.mxu0 0
      %683 = vmatprep.subr.bf16.mxu0 0
      %684 = vmatpush1.bf16.msra.mxu0 0
      %685 = vmatprep.subr.bf16.mxu0 0
      %686 = vmatpush1.bf16.msra.mxu0 0
      %687 = vmatprep.subr.bf16.mxu0 0
      %688 = vmatpush1.bf16.msra.mxu0 0
      %689 = vmatprep.subr.bf16.mxu0 0
      %690 = vmatpush1.bf16.msra.mxu0 0
      %691 = vmatprep.subr.bf16.mxu0 0
      %692 = vmatpush1.bf16.msra.mxu0 0
      %693 = vmatprep.subr.bf16.mxu0 0
      %694 = vmatpush1.bf16.msra.mxu0 0
      %695 = vmatprep.subr.bf16.mxu0 0
      %696 = vmatpush1.bf16.msra.mxu0 0
      %697 = vmatprep.subr.bf16.mxu0 0
      %698 = vmatpush1.bf16.msra.mxu0 0
      %699 = vmatprep.mubr.bf16.mxu0 0
      %700 = vmatmul.mubr.bf16.gmra.mrb[0].mxu0 %v658
      %v701 = vpop.f32.mrb[0].mxu0
      %v702 = vadd.f32 0.0, %v701
      %v703 = vpop.f32.mrb[0].mxu0
      %v704 = vadd.f32 0.0, %v703
      %v705 = vpop.f32.mrb[0].mxu0
      %v706 = vpop.f32.mrb[0].mxu0
      %707 = vdwg.mxu0
      %v708 = vpack.c.bf16 %v651, %v651
      %v709 = vpack.c.bf16 %v652, %v652
      %s710 = scalar_lea.vmem %s4, 4
      %v711 = vld [vmem:[%s710] sm:$0xf]
      %v713 = vsel %vm656, %v711, 0
      %v716 = vsel %vm660, %v708, 0
      %v719 = vsel %vm660, %v709, 0
      %721 = vmatprep.subr.bf16.mxu0 %v719
      %722 = vmatpush1.bf16.msra.mxu0 %v716
      %723 = vmatprep.subr.bf16.mxu0 0
      %724 = vmatpush1.bf16.msra.mxu0 0
      %725 = vmatprep.subr.bf16.mxu0 0
      %726 = vmatpush1.bf16.msra.mxu0 0
      %727 = vmatprep.subr.bf16.mxu0 0
      %728 = vmatpush1.bf16.msra.mxu0 0
      %729 = vmatprep.subr.bf16.mxu0 0
      %730 = vmatpush1.bf16.msra.mxu0 0
      %731 = vmatprep.subr.bf16.mxu0 0
      %732 = vmatpush1.bf16.msra.mxu0 0
      %733 = vmatprep.subr.bf16.mxu0 0
      %734 = vmatpush1.bf16.msra.mxu0 0
      %735 = vmatprep.subr.bf16.mxu0 0
      %736 = vmatpush1.bf16.msra.mxu0 0
      %737 = vmatprep.subr.bf16.mxu0 0
      %738 = vmatpush1.bf16.msra.mxu0 0
      %739 = vmatprep.subr.bf16.mxu0 0
      %740 = vmatpush1.bf16.msra.mxu0 0
      %741 = vmatprep.subr.bf16.mxu0 0
      %742 = vmatpush1.bf16.msra.mxu0 0
      %743 = vmatprep.subr.bf16.mxu0 0
      %744 = vmatpush1.bf16.msra.mxu0 0
      %745 = vmatprep.subr.bf16.mxu0 0
      %746 = vmatpush1.bf16.msra.mxu0 0
      %747 = vmatprep.subr.bf16.mxu0 0
      %748 = vmatpush1.bf16.msra.mxu0 0
      %749 = vmatprep.subr.bf16.mxu0 0
      %750 = vmatpush1.bf16.msra.mxu0 0
      %751 = vmatprep.subr.bf16.mxu0 0
      %752 = vmatpush1.bf16.msra.mxu0 0
      %753 = vmatprep.mubr.bf16.mxu0 0
      %754 = vmatmul.mubr.bf16.gmra.mrb[0].mxu0 %v713
      %v755 = vpop.f32.mrb[0].mxu0
      %v756 = vadd.f32 0.0, %v755
      %v757 = vpop.f32.mrb[0].mxu0
      %v758 = vadd.f32 0.0, %v757
      %v759 = vpop.f32.mrb[0].mxu0
      %v760 = vpop.f32.mrb[0].mxu0
      %761 = vdwg.mxu0
      %v762 = vld [vmem:[%s5] sm:$0xff]
      %v763 = vld [vmem:[%s5 + $0x8] sm:$0xff]
      %765 = vset.pattern.permute.xlu0 0
      %766 = vperm.xlu0 %765, %v762
      %v767 = vpop.permute.xlu0 %766
      %770 = vset.pattern.permute.xlu0 0
      %771 = vperm.xlu0 %770, %v763
      %v772 = vpop.permute.xlu0 %771
      %v774 = vadd.f32 %v702, %v767
      %v775 = vadd.f32 %v704, %v767
      %v776 = vadd.f32 %v756, %v772
      %v777 = vadd.f32 %v758, %v772
      %v778 = vmax.f32 %v774, 0.0
      %v779 = vmax.f32 %v775, 0.0
      %v780 = vmax.f32 %v776, 0.0
      %v781 = vmax.f32 %v777, 0.0
      %784 = vrot.lane.b32.xlu0 %v650, 17
      %v785 = vpop.permute.xlu0 %784
      %786 = vrot.lane.b32.xlu0 %v652, 17
      %v787 = vpop.permute.xlu0 %786
      %792 = vrot.lane.b32.xlu0 %v649, 17
      %v793 = vpop.permute.xlu0 %792
      %794 = vrot.lane.b32.xlu0 %v651, 17
      %v795 = vpop.permute.xlu0 %794
      %vm796 = vcmask 138240
      %v797 = vsel %vm796, %v793, %v785
      %v798 = vsel %vm796, %v795, %v787
      %v803 = vsel %vm796, %v785, %v793
      %v804 = vsel %vm796, %v787, %v795
      %v805 = vld [vmem:[%s8] ss:$8 sm:$0x3]
      %v807 = vlaneseq
      %v808 = vshrl.u32 %v807, 7
      %v809 = vsub.s32 0, %v808
      %v810 = vrot.slane %v805, %v809
      %v811 = vlaneseq
      %v812 = vshrl.u32 %v811, 7
      %v813 = vsub.s32 1, %v812
      %v814 = vrot.slane %v805, %v813
      %v817 = vmul.f32 %v803, %v810
      %v818 = vmul.f32 %v797, %v814
      %v819 = vmul.f32 %v804, %v810
      %v820 = vmul.f32 %v798, %v814
      %821 = vrot.lane.b32.xlu0 %v650, 16
      %v822 = vpop.permute.xlu0 %821
      %823 = vrot.lane.b32.xlu0 %v652, 16
      %v824 = vpop.permute.xlu0 %823
      %827 = vrot.lane.b32.xlu0 %v649, 16
      %v828 = vpop.permute.xlu0 %827
      %829 = vrot.lane.b32.xlu0 %v651, 16
      %v830 = vpop.permute.xlu0 %829
      %v831 = vsel %vm602, %v828, %v822
      %v832 = vsel %vm602, %v830, %v824
      %v837 = vsel %vm602, %v822, %v828
      %v838 = vsel %vm602, %v824, %v830
      %s839 = scalar_lea.vmem %s8, 1
      %v840 = vld [vmem:[%s839] ss:$8 sm:$0x3]
      %v842 = vlaneseq
      %v843 = vshrl.u32 %v842, 7
      %v844 = vsub.s32 0, %v843
      %v845 = vrot.slane %v840, %v844
      %v846 = vlaneseq
      %v847 = vshrl.u32 %v846, 7
      %v848 = vsub.s32 1, %v847
      %v849 = vrot.slane %v840, %v848
      %v852 = vmul.f32 %v837, %v845
      %v853 = vmul.f32 %v831, %v849
      %v854 = vmul.f32 %v838, %v845
      %v855 = vmul.f32 %v832, %v849
      %856 = vrot.lane.b32.xlu0 %v650, 15
      %v857 = vpop.permute.xlu0 %856
      %858 = vrot.lane.b32.xlu0 %v652, 15
      %v859 = vpop.permute.xlu0 %858
      %862 = vrot.lane.b32.xlu0 %v649, 15
      %v863 = vpop.permute.xlu0 %862
      %864 = vrot.lane.b32.xlu0 %v651, 15
      %v865 = vpop.permute.xlu0 %864
      %vm866 = vcmask 121856
      %v867 = vsel %vm866, %v863, %v857
      %v868 = vsel %vm866, %v865, %v859
      %v873 = vsel %vm866, %v857, %v863
      %v874 = vsel %vm866, %v859, %v865
      %s875 = scalar_lea.vmem %s8, 2
      %v876 = vld [vmem:[%s875] ss:$8 sm:$0x3]
      %v878 = vlaneseq
      %v879 = vshrl.u32 %v878, 7
      %v880 = vsub.s32 0, %v879
      %v881 = vrot.slane %v876, %v880
      %v882 = vlaneseq
      %v883 = vshrl.u32 %v882, 7
      %v884 = vsub.s32 1, %v883
      %v885 = vrot.slane %v876, %v884
      %v888 = vmul.f32 %v873, %v881
      %v889 = vmul.f32 %v867, %v885
      %v890 = vmul.f32 %v874, %v881
      %v891 = vmul.f32 %v868, %v885
      %892 = vrot.lane.b32.xlu0 %v650, 1
      %v893 = vpop.permute.xlu0 %892
      %894 = vrot.lane.b32.xlu0 %v652, 1
      %v895 = vpop.permute.xlu0 %894
      %898 = vrot.lane.b32.xlu0 %v649, 1
      %v899 = vpop.permute.xlu0 %898
      %900 = vrot.lane.b32.xlu0 %v651, 1
      %v901 = vpop.permute.xlu0 %900
      %vm902 = vcmask 7168
      %v903 = vsel %vm902, %v899, %v893
      %v904 = vsel %vm902, %v901, %v895
      %v909 = vsel %vm902, %v893, %v899
      %v910 = vsel %vm902, %v895, %v901
      %s911 = scalar_lea.vmem %s8, 3
      %v912 = vld [vmem:[%s911] ss:$8 sm:$0x3]
      %v914 = vlaneseq
      %v915 = vshrl.u32 %v914, 7
      %v916 = vsub.s32 0, %v915
      %v917 = vrot.slane %v912, %v916
      %v918 = vlaneseq
      %v919 = vshrl.u32 %v918, 7
      %v920 = vsub.s32 1, %v919
      %v921 = vrot.slane %v912, %v920
      %v924 = vmul.f32 %v909, %v917
      %v925 = vmul.f32 %v903, %v921
      %v926 = vmul.f32 %v910, %v917
      %v927 = vmul.f32 %v904, %v921
      %s928 = scalar_lea.vmem %s8, 4
      %v929 = vld [vmem:[%s928] ss:$8 sm:$0x3]
      %v931 = vlaneseq
      %v932 = vshrl.u32 %v931, 7
      %v933 = vsub.s32 0, %v932
      %v934 = vrot.slane %v929, %v933
      %v935 = vlaneseq
      %v936 = vshrl.u32 %v935, 7
      %v937 = vsub.s32 1, %v936
      %v938 = vrot.slane %v929, %v937
      %v941 = vmul.f32 %v649, %v934
      %v942 = vmul.f32 %v650, %v938
      %v943 = vmul.f32 %v651, %v934
      %v944 = vmul.f32 %v652, %v938
      %945 = vrot.lane.b32.xlu0 %v649, 127
      %v946 = vpop.permute.xlu0 %945
      %947 = vrot.lane.b32.xlu0 %v650, 127
      %v948 = vpop.permute.xlu0 %947
      %949 = vrot.lane.b32.xlu0 %v651, 127
      %v950 = vpop.permute.xlu0 %949
      %951 = vrot.lane.b32.xlu0 %v652, 127
      %v952 = vpop.permute.xlu0 %951
      %vm953 = vcmask 1039360
      %v954 = vsel %vm953, %v946, %v948
      %v955 = vsel %vm953, %v950, %v952
      %v962 = vsel %vm953, %v948, %v946
      %v963 = vsel %vm953, %v952, %v950
      %s964 = scalar_lea.vmem %s8, 5
      %v965 = vld [vmem:[%s964] ss:$8 sm:$0x3]
      %v967 = vlaneseq
      %v968 = vshrl.u32 %v967, 7
      %v969 = vsub.s32 0, %v968
      %v970 = vrot.slane %v965, %v969
      %v971 = vlaneseq
      %v972 = vshrl.u32 %v971, 7
      %v973 = vsub.s32 1, %v972
      %v974 = vrot.slane %v965, %v973
      %v977 = vmul.f32 %v954, %v970
      %v978 = vmul.f32 %v962, %v974
      %v979 = vmul.f32 %v955, %v970
      %v980 = vmul.f32 %v963, %v974
      %981 = vrot.lane.b32.xlu0 %v649, 113
      %v982 = vpop.permute.xlu0 %981
      %983 = vrot.lane.b32.xlu0 %v650, 113
      %v984 = vpop.permute.xlu0 %983
      %985 = vrot.lane.b32.xlu0 %v651, 113
      %v986 = vpop.permute.xlu0 %985
      %987 = vrot.lane.b32.xlu0 %v652, 113
      %v988 = vpop.permute.xlu0 %987
      %vm989 = vcmask 924672
      %v990 = vsel %vm989, %v982, %v984
      %v991 = vsel %vm989, %v986, %v988
      %v998 = vsel %vm989, %v984, %v982
      %v999 = vsel %vm989, %v988, %v986
      %s1000 = scalar_lea.vmem %s8, 6
      %v1001 = vld [vmem:[%s1000] ss:$8 sm:$0x3]
      %v1003 = vlaneseq
      %v1004 = vshrl.u32 %v1003, 7
      %v1005 = vsub.s32 0, %v1004
      %v1006 = vrot.slane %v1001, %v1005
      %v1007 = vlaneseq
      %v1008 = vshrl.u32 %v1007, 7
      %v1009 = vsub.s32 1, %v1008
      %v1010 = vrot.slane %v1001, %v1009
      %v1013 = vmul.f32 %v990, %v1006
      %v1014 = vmul.f32 %v998, %v1010
      %v1015 = vmul.f32 %v991, %v1006
      %v1016 = vmul.f32 %v999, %v1010
      %1017 = vrot.lane.b32.xlu0 %v649, 112
      %v1018 = vpop.permute.xlu0 %1017
      %1019 = vrot.lane.b32.xlu0 %v650, 112
      %v1020 = vpop.permute.xlu0 %1019
      %1021 = vrot.lane.b32.xlu0 %v651, 112
      %v1022 = vpop.permute.xlu0 %1021
      %1023 = vrot.lane.b32.xlu0 %v652, 112
      %v1024 = vpop.permute.xlu0 %1023
      %vm1025 = vcmask 916480
      %v1026 = vsel %vm1025, %v1018, %v1020
      %v1027 = vsel %vm1025, %v1022, %v1024
      %v1034 = vsel %vm1025, %v1020, %v1018
      %v1035 = vsel %vm1025, %v1024, %v1022
      %s1036 = scalar_lea.vmem %s8, 7
      %v1037 = vld [vmem:[%s1036] ss:$8 sm:$0x3]
      %v1039 = vlaneseq
      %v1040 = vshrl.u32 %v1039, 7
      %v1041 = vsub.s32 0, %v1040
      %v1042 = vrot.slane %v1037, %v1041
      %v1043 = vlaneseq
      %v1044 = vshrl.u32 %v1043, 7
      %v1045 = vsub.s32 1, %v1044
      %v1046 = vrot.slane %v1037, %v1045
      %v1049 = vmul.f32 %v1026, %v1042
      %v1050 = vmul.f32 %v1034, %v1046
      %v1051 = vmul.f32 %v1027, %v1042
      %v1052 = vmul.f32 %v1035, %v1046
      %1053 = vrot.lane.b32.xlu0 %v649, 111
      %v1054 = vpop.permute.xlu0 %1053
      %1055 = vrot.lane.b32.xlu0 %v650, 111
      %v1056 = vpop.permute.xlu0 %1055
      %1057 = vrot.lane.b32.xlu0 %v651, 111
      %v1058 = vpop.permute.xlu0 %1057
      %1059 = vrot.lane.b32.xlu0 %v652, 111
      %v1060 = vpop.permute.xlu0 %1059
      %vm1061 = vcmask 908288
      %v1062 = vsel %vm1061, %v1054, %v1056
      %v1063 = vsel %vm1061, %v1058, %v1060
      %v1070 = vsel %vm1061, %v1056, %v1054
      %v1071 = vsel %vm1061, %v1060, %v1058
      %s1072 = scalar_lea.vmem %s8, 16
      %v1073 = vld [vmem:[%s1072] ss:$8 sm:$0x3]
      %v1075 = vlaneseq
      %v1076 = vshrl.u32 %v1075, 7
      %v1077 = vsub.s32 0, %v1076
      %v1078 = vrot.slane %v1073, %v1077
      %v1079 = vlaneseq
      %v1080 = vshrl.u32 %v1079, 7
      %v1081 = vsub.s32 1, %v1080
      %v1082 = vrot.slane %v1073, %v1081
      %v1085 = vmul.f32 %v1062, %v1078
      %v1086 = vmul.f32 %v1070, %v1082
      %v1087 = vmul.f32 %v1063, %v1078
      %v1088 = vmul.f32 %v1071, %v1082
      %v1089 = vpack.c.bf16 %v852, %v817
      %v1090 = vpack.c.bf16 %v853, %v818
      %v1091 = vpack.c.bf16 %v924, %v888
      %v1092 = vpack.c.bf16 %v925, %v889
      %v1093 = vpack.c.bf16 %v977, %v941
      %v1094 = vpack.c.bf16 %v978, %v942
      %v1095 = vpack.c.bf16 %v1049, %v1013
      %v1096 = vpack.c.bf16 %v1050, %v1014
      %v1097 = vpack.c.bf16 %v1085, %v1085
      %v1098 = vpack.c.bf16 %v1086, %v1086
      %v1099 = vld [vmem:[%s6] sm:$0xf]
      %vm1100 = vcmask 588800
      %v1102 = vsel %vm1100, %v1099, 0
      %v1105 = vsel %vm660, %v1097, 0
      %v1108 = vsel %vm660, %v1098, 0
      %1110 = vmatprep.subr.bf16.mxu0 %v1090
      %1111 = vmatpush1.bf16.msra.mxu0 %v1089
      %1112 = vmatprep.subr.bf16.mxu0 %v1092
      %1113 = vmatpush1.bf16.msra.mxu0 %v1091
      %1114 = vmatprep.subr.bf16.mxu0 %v1094
      %1115 = vmatpush1.bf16.msra.mxu0 %v1093
      %1116 = vmatprep.subr.bf16.mxu0 %v1096
      %1117 = vmatpush1.bf16.msra.mxu0 %v1095
      %1118 = vmatprep.subr.bf16.mxu0 %v1108
      %1119 = vmatpush1.bf16.msra.mxu0 %v1105
      %1120 = vmatprep.subr.bf16.mxu0 0
      %1121 = vmatpush1.bf16.msra.mxu0 0
      %1122 = vmatprep.subr.bf16.mxu0 0
      %1123 = vmatpush1.bf16.msra.mxu0 0
      %1124 = vmatprep.subr.bf16.mxu0 0
      %1125 = vmatpush1.bf16.msra.mxu0 0
      %1126 = vmatprep.subr.bf16.mxu0 0
      %1127 = vmatpush1.bf16.msra.mxu0 0
      %1128 = vmatprep.subr.bf16.mxu0 0
      %1129 = vmatpush1.bf16.msra.mxu0 0
      %1130 = vmatprep.subr.bf16.mxu0 0
      %1131 = vmatpush1.bf16.msra.mxu0 0
      %1132 = vmatprep.subr.bf16.mxu0 0
      %1133 = vmatpush1.bf16.msra.mxu0 0
      %1134 = vmatprep.subr.bf16.mxu0 0
      %1135 = vmatpush1.bf16.msra.mxu0 0
      %1136 = vmatprep.subr.bf16.mxu0 0
      %1137 = vmatpush1.bf16.msra.mxu0 0
      %1138 = vmatprep.subr.bf16.mxu0 0
      %1139 = vmatpush1.bf16.msra.mxu0 0
      %1140 = vmatprep.subr.bf16.mxu0 0
      %1141 = vmatpush1.bf16.msra.mxu0 0
      %1142 = vmatprep.mubr.bf16.mxu0 0
      %1143 = vmatmul.mubr.bf16.gmra.mrb[0].mxu0 %v1102
      %v1144 = vpop.f32.mrb[0].mxu0
      %v1145 = vadd.f32 0.0, %v1144
      %v1146 = vpop.f32.mrb[0].mxu0
      %v1147 = vadd.f32 0.0, %v1146
      %v1148 = vpop.f32.mrb[0].mxu0
      %v1149 = vpop.f32.mrb[0].mxu0
      %1150 = vdwg.mxu0
      %v1151 = vpack.c.bf16 %v854, %v819
      %v1152 = vpack.c.bf16 %v855, %v820
      %v1153 = vpack.c.bf16 %v926, %v890
      %v1154 = vpack.c.bf16 %v927, %v891
      %v1155 = vpack.c.bf16 %v979, %v943
      %v1156 = vpack.c.bf16 %v980, %v944
      %v1157 = vpack.c.bf16 %v1051, %v1015
      %v1158 = vpack.c.bf16 %v1052, %v1016
      %v1159 = vpack.c.bf16 %v1087, %v1087
      %v1160 = vpack.c.bf16 %v1088, %v1088
      %s1161 = scalar_lea.vmem %s6, 4
      %v1162 = vld [vmem:[%s1161] sm:$0xf]
      %v1164 = vsel %vm1100, %v1162, 0
      %v1167 = vsel %vm660, %v1159, 0
      %v1170 = vsel %vm660, %v1160, 0
      %1172 = vmatprep.subr.bf16.mxu0 %v1152
      %1173 = vmatpush1.bf16.msra.mxu0 %v1151
      %1174 = vmatprep.subr.bf16.mxu0 %v1154
      %1175 = vmatpush1.bf16.msra.mxu0 %v1153
      %1176 = vmatprep.subr.bf16.mxu0 %v1156
      %1177 = vmatpush1.bf16.msra.mxu0 %v1155
      %1178 = vmatprep.subr.bf16.mxu0 %v1158
      %1179 = vmatpush1.bf16.msra.mxu0 %v1157
      %1180 = vmatprep.subr.bf16.mxu0 %v1170
      %1181 = vmatpush1.bf16.msra.mxu0 %v1167
      %1182 = vmatprep.subr.bf16.mxu0 0
      %1183 = vmatpush1.bf16.msra.mxu0 0
      %1184 = vmatprep.subr.bf16.mxu0 0
      %1185 = vmatpush1.bf16.msra.mxu0 0
      %1186 = vmatprep.subr.bf16.mxu0 0
      %1187 = vmatpush1.bf16.msra.mxu0 0
      %1188 = vmatprep.subr.bf16.mxu0 0
      %1189 = vmatpush1.bf16.msra.mxu0 0
      %1190 = vmatprep.subr.bf16.mxu0 0
      %1191 = vmatpush1.bf16.msra.mxu0 0
      %1192 = vmatprep.subr.bf16.mxu0 0
      %1193 = vmatpush1.bf16.msra.mxu0 0
      %1194 = vmatprep.subr.bf16.mxu0 0
      %1195 = vmatpush1.bf16.msra.mxu0 0
      %1196 = vmatprep.subr.bf16.mxu0 0
      %1197 = vmatpush1.bf16.msra.mxu0 0
      %1198 = vmatprep.subr.bf16.mxu0 0
      %1199 = vmatpush1.bf16.msra.mxu0 0
      %1200 = vmatprep.subr.bf16.mxu0 0
      %1201 = vmatpush1.bf16.msra.mxu0 0
      %1202 = vmatprep.subr.bf16.mxu0 0
      %1203 = vmatpush1.bf16.msra.mxu0 0
      %1204 = vmatprep.mubr.bf16.mxu0 0
      %1205 = vmatmul.mubr.bf16.gmra.mrb[0].mxu0 %v1164
      %v1206 = vpop.f32.mrb[0].mxu0
      %v1207 = vadd.f32 0.0, %v1206
      %v1208 = vpop.f32.mrb[0].mxu0
      %v1209 = vadd.f32 0.0, %v1208
      %v1210 = vpop.f32.mrb[0].mxu0
      %v1211 = vpop.f32.mrb[0].mxu0
      %1212 = vdwg.mxu0
      %v1213 = vld [vmem:[%s7] sm:$0xff]
      %v1214 = vld [vmem:[%s7 + $0x8] sm:$0xff]
      %1216 = vset.pattern.permute.xlu0 0
      %1217 = vperm.xlu0 %1216, %v1213
      %v1218 = vpop.permute.xlu0 %1217
      %1221 = vset.pattern.permute.xlu0 0
      %1222 = vperm.xlu0 %1221, %v1214
      %v1223 = vpop.permute.xlu0 %1222
      %v1225 = vadd.f32 %v1145, %v1218
      %v1226 = vadd.f32 %v1147, %v1218
      %v1227 = vadd.f32 %v1207, %v1223
      %v1228 = vadd.f32 %v1209, %v1223
      %v1229 = vmax.f32 %v1225, 0.0
      %v1230 = vmax.f32 %v1226, 0.0
      %v1231 = vmax.f32 %v1227, 0.0
      %v1232 = vmax.f32 %v1228, 0.0
      %v1233 = vadd.f32 %v778, %v1229
      %v1234 = vadd.f32 %v779, %v1230
      %v1235 = vadd.f32 %v780, %v1231
      %v1236 = vadd.f32 %v781, %v1232
      %v1237 = vadd.f32 %v1233, %v1234
      %1238 = vadd.xlane.f32.xlu0 %v1237
      %v1239 = vpop.xlane.xlu0 %1238
      %v1240 = vadd.f32 %v1235, %v1236
      %1241 = vadd.xlane.f32.xlu0 %v1240
      %v1242 = vpop.xlane.xlu0 %1241
      %v1243 = vmul.f32 %v1239, 0.00390625
      %v1244 = vmul.f32 %v1242, 0.00390625
      %v1245 = vld [vmem:[%s9] sm:$0xff]
      %v1246 = vld [vmem:[%s10] sm:$0xff]
      %v1248 = vsel %vm602, %v1245, 0
      %1250 = vmatprep.subr.mxu0 0.0
      %1251 = vmatpush1.msra.mxu0 %v1243
      %1252 = vmatprep.subr.mxu0 0.0
      %1253 = vmatpush1.msra.mxu0 %v1244
      %1254 = vmatprep.subr.mxu0 0.0
      %1255 = vmatpush1.msra.mxu0 0.0
      %1256 = vmatprep.subr.mxu0 0.0
      %1257 = vmatpush1.msra.mxu0 0.0
      %1258 = vmatprep.subr.mxu0 0.0
      %1259 = vmatpush1.msra.mxu0 0.0
      %1260 = vmatprep.subr.mxu0 0.0
      %1261 = vmatpush1.msra.mxu0 0.0
      %1262 = vmatprep.subr.mxu0 0.0
      %1263 = vmatpush1.msra.mxu0 0.0
      %1264 = vmatprep.subr.mxu0 0.0
      %1265 = vmatpush1.msra.mxu0 0.0
      %1266 = vmatprep.subr.mxu0 0.0
      %1267 = vmatpush1.msra.mxu0 0.0
      %1268 = vmatprep.subr.mxu0 0.0
      %1269 = vmatpush1.msra.mxu0 0.0
      %1270 = vmatprep.subr.mxu0 0.0
      %1271 = vmatpush1.msra.mxu0 0.0
      %1272 = vmatprep.subr.mxu0 0.0
      %1273 = vmatpush1.msra.mxu0 0.0
      %1274 = vmatprep.subr.mxu0 0.0
      %1275 = vmatpush1.msra.mxu0 0.0
      %1276 = vmatprep.subr.mxu0 0.0
      %1277 = vmatpush1.msra.mxu0 0.0
      %1278 = vmatprep.subr.mxu0 0.0
      %1279 = vmatpush1.msra.mxu0 0.0
      %1280 = vmatprep.subr.mxu0 0.0
      %1281 = vmatpush1.msra.mxu0 0.0
      %1282 = vmatprep.subr.mxu0 0.0
      %1283 = vmatpush1.msra.mxu0 0.0
      %1284 = vmatprep.subr.mxu0 0.0
      %1285 = vmatpush1.msra.mxu0 0.0
      %1286 = vmatprep.subr.mxu0 0.0
      %1287 = vmatpush1.msra.mxu0 0.0
      %1288 = vmatprep.subr.mxu0 0.0
      %1289 = vmatpush1.msra.mxu0 0.0
      %1290 = vmatprep.subr.mxu0 0.0
      %1291 = vmatpush1.msra.mxu0 0.0
      %1292 = vmatprep.subr.mxu0 0.0
      %1293 = vmatpush1.msra.mxu0 0.0
      %1294 = vmatprep.subr.mxu0 0.0
      %1295 = vmatpush1.msra.mxu0 0.0
      %1296 = vmatprep.subr.mxu0 0.0
      %1297 = vmatpush1.msra.mxu0 0.0
      %1298 = vmatprep.subr.mxu0 0.0
      %1299 = vmatpush1.msra.mxu0 0.0
      %1300 = vmatprep.subr.mxu0 0.0
      %1301 = vmatpush1.msra.mxu0 0.0
      %1302 = vmatprep.subr.mxu0 0.0
      %1303 = vmatpush1.msra.mxu0 0.0
      %1304 = vmatprep.subr.mxu0 0.0
      %1305 = vmatpush1.msra.mxu0 0.0
      %1306 = vmatprep.subr.mxu0 0.0
      %1307 = vmatpush1.msra.mxu0 0.0
      %1308 = vmatprep.subr.mxu0 0.0
      %1309 = vmatpush1.msra.mxu0 0.0
      %1310 = vmatprep.subr.mxu0 0.0
      %1311 = vmatpush1.msra.mxu0 0.0
      %1312 = vmatprep.subr.mxu0 0.0
      %1313 = vmatpush1.msra.mxu0 0.0
      %1314 = vmatprep.mubr.f32.mxu0 0.0
      %1315 = vmatmul.mubr.f32.gmra.mrb[0].mxu0 %v1248
      %v1316 = vpop.f32.mrb[0].mxu0
      %v1317 = vadd.f32 %v1246, %v1316
      %v1318 = vpop.f32.mrb[0].mxu0
      %1319 = vdwg.mxu0
      %v1320 = vld [vmem:[%s11] sm:$0xff]
      %v1321 = vld [vmem:[%s11 + $0x8] sm:$0xff]
      %v1322 = vld [vmem:[%s12] sm:$0xff]
      %v1323 = vld [vmem:[%s12 + $0x8] sm:$0xff]
      %v1325 = vsel %vm656, %v1320, 0
      %v1328 = vsel %vm656, %v1321, 0
      %1330 = vmatprep.subr.mxu0 0.0
      %1331 = vmatpush1.msra.mxu0 %v1317
      %1332 = vmatprep.subr.mxu0 0.0
      %1333 = vmatpush1.msra.mxu0 0.0
      %1334 = vmatprep.subr.mxu0 0.0
      %1335 = vmatpush1.msra.mxu0 0.0
      %1336 = vmatprep.subr.mxu0 0.0
      %1337 = vmatpush1.msra.mxu0 0.0
      %1338 = vmatprep.subr.mxu0 0.0
      %1339 = vmatpush1.msra.mxu0 0.0
      %1340 = vmatprep.subr.mxu0 0.0
      %1341 = vmatpush1.msra.mxu0 0.0
      %1342 = vmatprep.subr.mxu0 0.0
      %1343 = vmatpush1.msra.mxu0 0.0
      %1344 = vmatprep.subr.mxu0 0.0
      %1345 = vmatpush1.msra.mxu0 0.0
      %1346 = vmatprep.subr.mxu0 0.0
      %1347 = vmatpush1.msra.mxu0 0.0
      %1348 = vmatprep.subr.mxu0 0.0
      %1349 = vmatpush1.msra.mxu0 0.0
      %1350 = vmatprep.subr.mxu0 0.0
      %1351 = vmatpush1.msra.mxu0 0.0
      %1352 = vmatprep.subr.mxu0 0.0
      %1353 = vmatpush1.msra.mxu0 0.0
      %1354 = vmatprep.subr.mxu0 0.0
      %1355 = vmatpush1.msra.mxu0 0.0
      %1356 = vmatprep.subr.mxu0 0.0
      %1357 = vmatpush1.msra.mxu0 0.0
      %1358 = vmatprep.subr.mxu0 0.0
      %1359 = vmatpush1.msra.mxu0 0.0
      %1360 = vmatprep.subr.mxu0 0.0
      %1361 = vmatpush1.msra.mxu0 0.0
      %1362 = vmatprep.subr.mxu0 0.0
      %1363 = vmatpush1.msra.mxu0 0.0
      %1364 = vmatprep.subr.mxu0 0.0
      %1365 = vmatpush1.msra.mxu0 0.0
      %1366 = vmatprep.subr.mxu0 0.0
      %1367 = vmatpush1.msra.mxu0 0.0
      %1368 = vmatprep.subr.mxu0 0.0
      %1369 = vmatpush1.msra.mxu0 0.0
      %1370 = vmatprep.subr.mxu0 0.0
      %1371 = vmatpush1.msra.mxu0 0.0
      %1372 = vmatprep.subr.mxu0 0.0
      %1373 = vmatpush1.msra.mxu0 0.0
      %1374 = vmatprep.subr.mxu0 0.0
      %1375 = vmatpush1.msra.mxu0 0.0
      %1376 = vmatprep.subr.mxu0 0.0
      %1377 = vmatpush1.msra.mxu0 0.0
      %1378 = vmatprep.subr.mxu0 0.0
      %1379 = vmatpush1.msra.mxu0 0.0
      %1380 = vmatprep.subr.mxu0 0.0
      %1381 = vmatpush1.msra.mxu0 0.0
      %1382 = vmatprep.subr.mxu0 0.0
      %1383 = vmatpush1.msra.mxu0 0.0
      %1384 = vmatprep.subr.mxu0 0.0
      %1385 = vmatpush1.msra.mxu0 0.0
      %1386 = vmatprep.subr.mxu0 0.0
      %1387 = vmatpush1.msra.mxu0 0.0
      %1388 = vmatprep.subr.mxu0 0.0
      %1389 = vmatpush1.msra.mxu0 0.0
      %1390 = vmatprep.subr.mxu0 0.0
      %1391 = vmatpush1.msra.mxu0 0.0
      %1392 = vmatprep.subr.mxu0 0.0
      %1393 = vmatpush1.msra.mxu0 0.0
      %1394 = vmatprep.mubr.f32.mxu0 0.0
      %1395 = vmatmul.mubr.f32.gmra.mrb[0].mxu0 %v1325
      %v1396 = vpop.f32.mrb[0].mxu0
      %v1397 = vadd.f32 %v1322, %v1396
      %v1398 = vpop.f32.mrb[0].mxu0
      %1399 = vmatprep.mubr.f32.mxu0 0.0
      %1400 = vmatmul.mubr.f32.gmra.mrb[0].mxu0 %v1328
      %v1401 = vpop.f32.mrb[0].mxu0
      %v1402 = vadd.f32 %v1323, %v1401
      %v1403 = vpop.f32.mrb[0].mxu0
      %1404 = vdwg.mxu0
      %s1405 = scalar_lea.vmem %s11, 16
      %v1406 = vld [vmem:[%s1405] sm:$0xff]
      %v1407 = vld [vmem:[%s1405 + $0x8] sm:$0xff]
      %s1408 = scalar_lea.vmem %s12, 16
      %v1409 = vld [vmem:[%s1408] sm:$0xff]
      %v1410 = vld [vmem:[%s1408 + $0x8] sm:$0xff]
      %v1412 = vsel %vm656, %v1406, 0
      %v1415 = vsel %vm656, %v1407, 0
      %1417 = vmatprep.subr.mxu0 0.0
      %1418 = vmatpush1.msra.mxu0 %v1317
      %1419 = vmatprep.subr.mxu0 0.0
      %1420 = vmatpush1.msra.mxu0 0.0
      %1421 = vmatprep.subr.mxu0 0.0
      %1422 = vmatpush1.msra.mxu0 0.0
      %1423 = vmatprep.subr.mxu0 0.0
      %1424 = vmatpush1.msra.mxu0 0.0
      %1425 = vmatprep.subr.mxu0 0.0
      %1426 = vmatpush1.msra.mxu0 0.0
      %1427 = vmatprep.subr.mxu0 0.0
      %1428 = vmatpush1.msra.mxu0 0.0
      %1429 = vmatprep.subr.mxu0 0.0
      %1430 = vmatpush1.msra.mxu0 0.0
      %1431 = vmatprep.subr.mxu0 0.0
      %1432 = vmatpush1.msra.mxu0 0.0
      %1433 = vmatprep.subr.mxu0 0.0
      %1434 = vmatpush1.msra.mxu0 0.0
      %1435 = vmatprep.subr.mxu0 0.0
      %1436 = vmatpush1.msra.mxu0 0.0
      %1437 = vmatprep.subr.mxu0 0.0
      %1438 = vmatpush1.msra.mxu0 0.0
      %1439 = vmatprep.subr.mxu0 0.0
      %1440 = vmatpush1.msra.mxu0 0.0
      %1441 = vmatprep.subr.mxu0 0.0
      %1442 = vmatpush1.msra.mxu0 0.0
      %1443 = vmatprep.subr.mxu0 0.0
      %1444 = vmatpush1.msra.mxu0 0.0
      %1445 = vmatprep.subr.mxu0 0.0
      %1446 = vmatpush1.msra.mxu0 0.0
      %1447 = vmatprep.subr.mxu0 0.0
      %1448 = vmatpush1.msra.mxu0 0.0
      %1449 = vmatprep.subr.mxu0 0.0
      %1450 = vmatpush1.msra.mxu0 0.0
      %1451 = vmatprep.subr.mxu0 0.0
      %1452 = vmatpush1.msra.mxu0 0.0
      %1453 = vmatprep.subr.mxu0 0.0
      %1454 = vmatpush1.msra.mxu0 0.0
      %1455 = vmatprep.subr.mxu0 0.0
      %1456 = vmatpush1.msra.mxu0 0.0
      %1457 = vmatprep.subr.mxu0 0.0
      %1458 = vmatpush1.msra.mxu0 0.0
      %1459 = vmatprep.subr.mxu0 0.0
      %1460 = vmatpush1.msra.mxu0 0.0
      %1461 = vmatprep.subr.mxu0 0.0
      %1462 = vmatpush1.msra.mxu0 0.0
      %1463 = vmatprep.subr.mxu0 0.0
      %1464 = vmatpush1.msra.mxu0 0.0
      %1465 = vmatprep.subr.mxu0 0.0
      %1466 = vmatpush1.msra.mxu0 0.0
      %1467 = vmatprep.subr.mxu0 0.0
      %1468 = vmatpush1.msra.mxu0 0.0
      %1469 = vmatprep.subr.mxu0 0.0
      %1470 = vmatpush1.msra.mxu0 0.0
      %1471 = vmatprep.subr.mxu0 0.0
      %1472 = vmatpush1.msra.mxu0 0.0
      %1473 = vmatprep.subr.mxu0 0.0
      %1474 = vmatpush1.msra.mxu0 0.0
      %1475 = vmatprep.subr.mxu0 0.0
      %1476 = vmatpush1.msra.mxu0 0.0
      %1477 = vmatprep.subr.mxu0 0.0
      %1478 = vmatpush1.msra.mxu0 0.0
      %1479 = vmatprep.subr.mxu0 0.0
      %1480 = vmatpush1.msra.mxu0 0.0
      %1481 = vmatprep.mubr.f32.mxu0 0.0
      %1482 = vmatmul.mubr.f32.gmra.mrb[0].mxu0 %v1412
      %v1483 = vpop.f32.mrb[0].mxu0
      %v1484 = vadd.f32 %v1409, %v1483
      %v1485 = vpop.f32.mrb[0].mxu0
      %1486 = vmatprep.mubr.f32.mxu0 0.0
      %1487 = vmatmul.mubr.f32.gmra.mrb[0].mxu0 %v1415
      %v1488 = vpop.f32.mrb[0].mxu0
      %v1489 = vadd.f32 %v1410, %v1488
      %v1490 = vpop.f32.mrb[0].mxu0
      %1491 = vdwg.mxu0
      %v1492 = vmax.f32 %v1397, %v1484
      %v1493 = vmax.f32 %v1402, %v1489
      %v1494 = vsub.f32 %v1397, %v1492
      %v1495 = vsub.f32 %v1402, %v1493
      %v1496 = vmul.f32 %v1494, 1.442695
      %v1497 = vpow.pop %v1496
      %v1498 = vmul.f32 %v1495, 1.442695
      %v1499 = vpow.pop %v1498
      %v1500 = vsub.f32 %v1484, %v1492
      %v1501 = vsub.f32 %v1489, %v1493
      %v1502 = vmul.f32 %v1500, 1.442695
      %v1503 = vpow.pop %v1502
      %v1504 = vmul.f32 %v1501, 1.442695
      %v1505 = vpow.pop %v1504
      %v1506 = vadd.f32 %v1497, %v1503
      %v1507 = vadd.f32 %v1499, %v1505
      %v1508 = vrcp.pop %v1506
      %v1509 = vrcp.pop %v1507
      %v1510 = vld [vmem:[%s13] sm:$0xff]
      %v1511 = vld [vmem:[%s13 + $0x8] sm:$0xff]
      %v1512 = vmul.f32 %v1497, %v1508
      %v1513 = vmul.f32 %v1499, %v1509
      %v1514 = vmul.f32 %v1512, %v1510
      %v1515 = vmul.f32 %v1513, %v1511
      %1517 = vset.pattern.permute.xlu0 0
      %1518 = vperm.xlu0 %1517, %v1514
      %v1519 = vpop.permute.xlu0 %1518
      %1522 = vset.pattern.permute.xlu0 0
      %1523 = vperm.xlu0 %1522, %v1515
      %v1524 = vpop.permute.xlu0 %1523
      %v1526 = vmul.f32 %v1519, %v778
      %v1527 = vmul.f32 %v1519, %v779
      %v1528 = vmul.f32 %v1524, %v780
      %v1529 = vmul.f32 %v1524, %v781
      %v1530 = vmul.f32 %v1503, %v1508
      %v1531 = vmul.f32 %v1505, %v1509
      %v1532 = vmul.f32 %v1530, %v1510
      %v1533 = vmul.f32 %v1531, %v1511
      %1535 = vset.pattern.permute.xlu0 0
      %1536 = vperm.xlu0 %1535, %v1532
      %v1537 = vpop.permute.xlu0 %1536
      %1540 = vset.pattern.permute.xlu0 0
      %1541 = vperm.xlu0 %1540, %v1533
      %v1542 = vpop.permute.xlu0 %1541
      %v1544 = vmul.f32 %v1537, %v1229
      %v1545 = vmul.f32 %v1537, %v1230
      %v1546 = vmul.f32 %v1542, %v1231
      %v1547 = vmul.f32 %v1542, %v1232
      %v1548 = vadd.f32 %v1526, %v1544
      %v1549 = vadd.f32 %v1527, %v1545
      %v1550 = vadd.f32 %v1528, %v1546
      %v1551 = vadd.f32 %v1529, %v1547
      %1553 = vset.pattern.permute.xlu0 1
      %1554 = vperm.xlu0 %1553, %v1510
      %v1555 = vpop.permute.xlu0 %1554
      %1558 = vset.pattern.permute.xlu0 1
      %1559 = vperm.xlu0 %1558, %v1511
      %v1560 = vpop.permute.xlu0 %1559
      %v1562 = vadd.f32 %v1548, %v1555
      %v1563 = vadd.f32 %v1549, %v1555
      %v1564 = vadd.f32 %v1550, %v1560
      %v1565 = vadd.f32 %v1551, %v1560
      %v1566 = vmax.f32 %v1562, 0.0
      %v1567 = vmax.f32 %v1563, 0.0
      %v1568 = vmax.f32 %v1564, 0.0
      %v1569 = vmax.f32 %v1565, 0.0
      %v1570 = vpack.c.bf16 %v1568, %v1566
      %v1571 = vpack.c.bf16 %v1569, %v1567
      %v1572 = vld [vmem:[%s14] sm:$0xf]
      %v1573 = vld [vmem:[%s14 + $0x4] sm:$0xf]
      %v1574 = vld [vmem:[%s14 + $0x8] sm:$0xf]
      %v1575 = vld [vmem:[%s14 + $0xc] sm:$0xf]
      %v1576 = vld [vmem:[%s14 + $0x10] sm:$0xf]
      %v1577 = vld [vmem:[%s14 + $0x14] sm:$0xf]
      %v1578 = vld [vmem:[%s14 + $0x18] sm:$0xf]
      %v1579 = vld [vmem:[%s14 + $0x1c] sm:$0xf]
      %v1580 = vld [vmem:[%s15] sm:$0xff]
      %v1581 = vld [vmem:[%s15 + $0x8] sm:$0xff]
      %v1582 = vld [vmem:[%s15 + $0x10] sm:$0xff]
      %v1583 = vld [vmem:[%s15 + $0x18] sm:$0xff]
      %v1584 = vld [vmem:[%s15 + $0x20] sm:$0xff]
      %v1585 = vld [vmem:[%s15 + $0x28] sm:$0xff]
      %v1586 = vld [vmem:[%s15 + $0x30] sm:$0xff]
      %v1587 = vld [vmem:[%s15 + $0x38] sm:$0xff]
      %1589 = vset.pattern.permute.xlu0 0
      %1590 = vperm.xlu0 %1589, %v1580
      %v1591 = vpop.permute.xlu0 %1590
      %1594 = vset.pattern.permute.xlu0 0
      %1595 = vperm.xlu0 %1594, %v1581
      %v1596 = vpop.permute.xlu0 %1595
      %1599 = vset.pattern.permute.xlu0 0
      %1600 = vperm.xlu0 %1599, %v1582
      %v1601 = vpop.permute.xlu0 %1600
      %1604 = vset.pattern.permute.xlu0 0
      %1605 = vperm.xlu0 %1604, %v1583
      %v1606 = vpop.permute.xlu0 %1605
      %1609 = vset.pattern.permute.xlu0 0
      %1610 = vperm.xlu0 %1609, %v1584
      %v1611 = vpop.permute.xlu0 %1610
      %1614 = vset.pattern.permute.xlu0 0
      %1615 = vperm.xlu0 %1614, %v1585
      %v1616 = vpop.permute.xlu0 %1615
      %1619 = vset.pattern.permute.xlu0 0
      %1620 = vperm.xlu0 %1619, %v1586
      %v1621 = vpop.permute.xlu0 %1620
      %1624 = vset.pattern.permute.xlu0 0
      %1625 = vperm.xlu0 %1624, %v1587
      %v1626 = vpop.permute.xlu0 %1625
      %v1636 = vunpack.c.l.b16 %v1572
      %v1637 = vunpack.c.l.b16 %v1573
      %v1638 = vunpack.c.l.b16 %v1574
      %v1639 = vunpack.c.l.b16 %v1575
      %v1640 = vunpack.c.l.b16 %v1576
      %v1641 = vunpack.c.l.b16 %v1577
      %v1642 = vunpack.c.l.b16 %v1578
      %v1643 = vunpack.c.l.b16 %v1579
      %v1644 = vpack.c.b16 %v1637, %v1636
      %v1645 = vpack.c.b16 %v1639, %v1638
      %v1646 = vpack.c.b16 %v1641, %v1640
      %v1647 = vpack.c.b16 %v1643, %v1642
      %v1649 = vsel %vm602, %v1644, 0
      %v1652 = vsel %vm602, %v1645, 0
      %v1655 = vsel %vm602, %v1646, 0
      %v1658 = vsel %vm602, %v1647, 0
      %1660 = vmatprep.subr.bf16.mxu0 %v1571
      %1661 = vmatpush1.bf16.msra.mxu0 %v1570
      %1662 = vmatprep.subr.bf16.mxu0 0
      %1663 = vmatpush1.bf16.msra.mxu0 0
      %1664 = vmatprep.subr.bf16.mxu0 0
      %1665 = vmatpush1.bf16.msra.mxu0 0
      %1666 = vmatprep.subr.bf16.mxu0 0
      %1667 = vmatpush1.bf16.msra.mxu0 0
      %1668 = vmatprep.subr.bf16.mxu0 0
      %1669 = vmatpush1.bf16.msra.mxu0 0
      %1670 = vmatprep.subr.bf16.mxu0 0
      %1671 = vmatpush1.bf16.msra.mxu0 0
      %1672 = vmatprep.subr.bf16.mxu0 0
      %1673 = vmatpush1.bf16.msra.mxu0 0
      %1674 = vmatprep.subr.bf16.mxu0 0
      %1675 = vmatpush1.bf16.msra.mxu0 0
      %1676 = vmatprep.subr.bf16.mxu0 0
      %1677 = vmatpush1.bf16.msra.mxu0 0
      %1678 = vmatprep.subr.bf16.mxu0 0
      %1679 = vmatpush1.bf16.msra.mxu0 0
      %1680 = vmatprep.subr.bf16.mxu0 0
      %1681 = vmatpush1.bf16.msra.mxu0 0
      %1682 = vmatprep.subr.bf16.mxu0 0
      %1683 = vmatpush1.bf16.msra.mxu0 0
      %1684 = vmatprep.subr.bf16.mxu0 0
      %1685 = vmatpush1.bf16.msra.mxu0 0
      %1686 = vmatprep.subr.bf16.mxu0 0
      %1687 = vmatpush1.bf16.msra.mxu0 0
      %1688 = vmatprep.subr.bf16.mxu0 0
      %1689 = vmatpush1.bf16.msra.mxu0 0
      %1690 = vmatprep.subr.bf16.mxu0 0
      %1691 = vmatpush1.bf16.msra.mxu0 0
      %1692 = vmatprep.mubr.bf16.mxu0 0
      %1693 = vmatmul.mubr.bf16.gmra.mrb[0].mxu0 %v1649
      %v1694 = vpop.f32.mrb[0].mxu0
      %v1695 = vadd.f32 %v1591, %v1694
      %v1696 = vpop.f32.mrb[0].mxu0
      %v1697 = vadd.f32 %v1591, %v1696
      %v1698 = vpop.f32.mrb[0].mxu0
      %v1699 = vadd.f32 %v1596, %v1698
      %v1700 = vpop.f32.mrb[0].mxu0
      %v1701 = vadd.f32 %v1596, %v1700
      %1702 = vmatprep.mubr.bf16.mxu0 0
      %1703 = vmatmul.mubr.bf16.gmra.mrb[0].mxu0 %v1652
      %v1704 = vpop.f32.mrb[0].mxu0
      %v1705 = vadd.f32 %v1601, %v1704
      %v1706 = vpop.f32.mrb[0].mxu0
      %v1707 = vadd.f32 %v1601, %v1706
      %v1708 = vpop.f32.mrb[0].mxu0
      %v1709 = vadd.f32 %v1606, %v1708
      %v1710 = vpop.f32.mrb[0].mxu0
      %v1711 = vadd.f32 %v1606, %v1710
      %1712 = vmatprep.mubr.bf16.mxu0 0
      %1713 = vmatmul.mubr.bf16.gmra.mrb[0].mxu0 %v1655
      %v1714 = vpop.f32.mrb[0].mxu0
      %v1715 = vadd.f32 %v1611, %v1714
      %v1716 = vpop.f32.mrb[0].mxu0
      %v1717 = vadd.f32 %v1611, %v1716
      %v1718 = vpop.f32.mrb[0].mxu0
      %v1719 = vadd.f32 %v1616, %v1718
      %v1720 = vpop.f32.mrb[0].mxu0
      %v1721 = vadd.f32 %v1616, %v1720
      %1722 = vmatprep.mubr.bf16.mxu0 0
      %1723 = vmatmul.mubr.bf16.gmra.mrb[0].mxu0 %v1658
      %v1724 = vpop.f32.mrb[0].mxu0
      %v1725 = vadd.f32 %v1621, %v1724
      %v1726 = vpop.f32.mrb[0].mxu0
      %v1727 = vadd.f32 %v1621, %v1726
      %v1728 = vpop.f32.mrb[0].mxu0
      %v1729 = vadd.f32 %v1626, %v1728
      %v1730 = vpop.f32.mrb[0].mxu0
      %v1731 = vadd.f32 %v1626, %v1730
      %1732 = vdwg.mxu0
      %v1733 = vld [vmem:[%s16] sm:$0xf]
      %v1734 = vld [vmem:[%s16 + $0x4] sm:$0xf]
      %v1735 = vld [vmem:[%s16 + $0x8] sm:$0xf]
      %v1736 = vld [vmem:[%s16 + $0xc] sm:$0xf]
      %v1737 = vld [vmem:[%s16 + $0x10] sm:$0xf]
      %v1738 = vld [vmem:[%s16 + $0x14] sm:$0xf]
      %v1739 = vld [vmem:[%s16 + $0x18] sm:$0xf]
      %v1740 = vld [vmem:[%s16 + $0x1c] sm:$0xf]
      %v1741 = vld [vmem:[%s17] sm:$0xff]
      %v1742 = vld [vmem:[%s17 + $0x8] sm:$0xff]
      %v1743 = vld [vmem:[%s17 + $0x10] sm:$0xff]
      %v1744 = vld [vmem:[%s17 + $0x18] sm:$0xff]
      %v1745 = vld [vmem:[%s17 + $0x20] sm:$0xff]
      %v1746 = vld [vmem:[%s17 + $0x28] sm:$0xff]
      %v1747 = vld [vmem:[%s17 + $0x30] sm:$0xff]
      %v1748 = vld [vmem:[%s17 + $0x38] sm:$0xff]
      %1750 = vset.pattern.permute.xlu0 0
      %1751 = vperm.xlu0 %1750, %v1741
      %v1752 = vpop.permute.xlu0 %1751
      %1755 = vset.pattern.permute.xlu0 0
      %1756 = vperm.xlu0 %1755, %v1742
      %v1757 = vpop.permute.xlu0 %1756
      %1760 = vset.pattern.permute.xlu0 0
      %1761 = vperm.xlu0 %1760, %v1743
      %v1762 = vpop.permute.xlu0 %1761
      %1765 = vset.pattern.permute.xlu0 0
      %1766 = vperm.xlu0 %1765, %v1744
      %v1767 = vpop.permute.xlu0 %1766
      %1770 = vset.pattern.permute.xlu0 0
      %1771 = vperm.xlu0 %1770, %v1745
      %v1772 = vpop.permute.xlu0 %1771
      %1775 = vset.pattern.permute.xlu0 0
      %1776 = vperm.xlu0 %1775, %v1746
      %v1777 = vpop.permute.xlu0 %1776
      %1780 = vset.pattern.permute.xlu0 0
      %1781 = vperm.xlu0 %1780, %v1747
      %v1782 = vpop.permute.xlu0 %1781
      %1785 = vset.pattern.permute.xlu0 0
      %1786 = vperm.xlu0 %1785, %v1748
      %v1787 = vpop.permute.xlu0 %1786
      %v1797 = vunpack.c.l.b16 %v1733
      %v1798 = vunpack.c.l.b16 %v1734
      %v1799 = vunpack.c.l.b16 %v1735
      %v1800 = vunpack.c.l.b16 %v1736
      %v1801 = vunpack.c.l.b16 %v1737
      %v1802 = vunpack.c.l.b16 %v1738
      %v1803 = vunpack.c.l.b16 %v1739
      %v1804 = vunpack.c.l.b16 %v1740
      %v1805 = vpack.c.b16 %v1798, %v1797
      %v1806 = vpack.c.b16 %v1800, %v1799
      %v1807 = vpack.c.b16 %v1802, %v1801
      %v1808 = vpack.c.b16 %v1804, %v1803
      %v1810 = vsel %vm602, %v1805, 0
      %v1813 = vsel %vm602, %v1806, 0
      %v1816 = vsel %vm602, %v1807, 0
      %v1819 = vsel %vm602, %v1808, 0
      %1821 = vmatprep.subr.bf16.mxu0 %v582
      %1822 = vmatpush1.bf16.msra.mxu0 %v581
      %1823 = vmatprep.subr.bf16.mxu0 0
      %1824 = vmatpush1.bf16.msra.mxu0 0
      %1825 = vmatprep.subr.bf16.mxu0 0
      %1826 = vmatpush1.bf16.msra.mxu0 0
      %1827 = vmatprep.subr.bf16.mxu0 0
      %1828 = vmatpush1.bf16.msra.mxu0 0
      %1829 = vmatprep.subr.bf16.mxu0 0
      %1830 = vmatpush1.bf16.msra.mxu0 0
      %1831 = vmatprep.subr.bf16.mxu0 0
      %1832 = vmatpush1.bf16.msra.mxu0 0
      %1833 = vmatprep.subr.bf16.mxu0 0
      %1834 = vmatpush1.bf16.msra.mxu0 0
      %1835 = vmatprep.subr.bf16.mxu0 0
      %1836 = vmatpush1.bf16.msra.mxu0 0
      %1837 = vmatprep.subr.bf16.mxu0 0
      %1838 = vmatpush1.bf16.msra.mxu0 0
      %1839 = vmatprep.subr.bf16.mxu0 0
      %1840 = vmatpush1.bf16.msra.mxu0 0
      %1841 = vmatprep.subr.bf16.mxu0 0
      %1842 = vmatpush1.bf16.msra.mxu0 0
      %1843 = vmatprep.subr.bf16.mxu0 0
      %1844 = vmatpush1.bf16.msra.mxu0 0
      %1845 = vmatprep.subr.bf16.mxu0 0
      %1846 = vmatpush1.bf16.msra.mxu0 0
      %1847 = vmatprep.subr.bf16.mxu0 0
      %1848 = vmatpush1.bf16.msra.mxu0 0
      %1849 = vmatprep.subr.bf16.mxu0 0
      %1850 = vmatpush1.bf16.msra.mxu0 0
      %1851 = vmatprep.subr.bf16.mxu0 0
      %1852 = vmatpush1.bf16.msra.mxu0 0
      %1853 = vmatprep.mubr.bf16.mxu0 0
      %1854 = vmatmul.mubr.bf16.gmra.mrb[0].mxu0 %v1810
      %v1855 = vpop.f32.mrb[0].mxu0
      %v1856 = vadd.f32 %v1752, %v1855
      %v1857 = vpop.f32.mrb[0].mxu0
      %v1858 = vadd.f32 %v1752, %v1857
      %v1859 = vpop.f32.mrb[0].mxu0
      %v1860 = vadd.f32 %v1757, %v1859
      %v1861 = vpop.f32.mrb[0].mxu0
      %v1862 = vadd.f32 %v1757, %v1861
      %1863 = vmatprep.mubr.bf16.mxu0 0
      %1864 = vmatmul.mubr.bf16.gmra.mrb[0].mxu0 %v1813
      %v1865 = vpop.f32.mrb[0].mxu0
      %v1866 = vadd.f32 %v1762, %v1865
      %v1867 = vpop.f32.mrb[0].mxu0
      %v1868 = vadd.f32 %v1762, %v1867
      %v1869 = vpop.f32.mrb[0].mxu0
      %v1870 = vadd.f32 %v1767, %v1869
      %v1871 = vpop.f32.mrb[0].mxu0
      %v1872 = vadd.f32 %v1767, %v1871
      %1873 = vmatprep.mubr.bf16.mxu0 0
      %1874 = vmatmul.mubr.bf16.gmra.mrb[0].mxu0 %v1816
      %v1875 = vpop.f32.mrb[0].mxu0
      %v1876 = vadd.f32 %v1772, %v1875
      %v1877 = vpop.f32.mrb[0].mxu0
      %v1878 = vadd.f32 %v1772, %v1877
      %v1879 = vpop.f32.mrb[0].mxu0
      %v1880 = vadd.f32 %v1777, %v1879
      %v1881 = vpop.f32.mrb[0].mxu0
      %v1882 = vadd.f32 %v1777, %v1881
      %1883 = vmatprep.mubr.bf16.mxu0 0
      %1884 = vmatmul.mubr.bf16.gmra.mrb[0].mxu0 %v1819
      %v1885 = vpop.f32.mrb[0].mxu0
      %v1886 = vadd.f32 %v1782, %v1885
      %v1887 = vpop.f32.mrb[0].mxu0
      %v1888 = vadd.f32 %v1782, %v1887
      %v1889 = vpop.f32.mrb[0].mxu0
      %v1890 = vadd.f32 %v1787, %v1889
      %v1891 = vpop.f32.mrb[0].mxu0
      %v1892 = vadd.f32 %v1787, %v1891
      %1893 = vdwg.mxu0
      %v1894 = vadd.f32 %v1856, %v1695
      %v1895 = vadd.f32 %v1858, %v1697
      %v1896 = vadd.f32 %v1860, %v1699
      %v1897 = vadd.f32 %v1862, %v1701
      %v1898 = vadd.f32 %v1866, %v1705
      %v1899 = vadd.f32 %v1868, %v1707
      %v1900 = vadd.f32 %v1870, %v1709
      %v1901 = vadd.f32 %v1872, %v1711
      %v1902 = vadd.f32 %v1876, %v1715
      %v1903 = vadd.f32 %v1878, %v1717
      %v1904 = vadd.f32 %v1880, %v1719
      %v1905 = vadd.f32 %v1882, %v1721
      %v1906 = vadd.f32 %v1886, %v1725
      %v1907 = vadd.f32 %v1888, %v1727
      %v1908 = vadd.f32 %v1890, %v1729
      %v1909 = vadd.f32 %v1892, %v1731
      %v1910 = vmax.f32 %v1894, 0.0
      %v1911 = vmax.f32 %v1895, 0.0
      %v1912 = vmax.f32 %v1896, 0.0
      %v1913 = vmax.f32 %v1897, 0.0
      %v1914 = vmax.f32 %v1898, 0.0
      %v1915 = vmax.f32 %v1899, 0.0
      %v1916 = vmax.f32 %v1900, 0.0
      %v1917 = vmax.f32 %v1901, 0.0
      %v1918 = vmax.f32 %v1902, 0.0
      %v1919 = vmax.f32 %v1903, 0.0
      %v1920 = vmax.f32 %v1904, 0.0
      %v1921 = vmax.f32 %v1905, 0.0
      %v1922 = vmax.f32 %v1906, 0.0
      %v1923 = vmax.f32 %v1907, 0.0
      %v1924 = vmax.f32 %v1908, 0.0
      %v1925 = vmax.f32 %v1909, 0.0
      %1926 = vst [vmem:[%s575] sm:$0xff] %v1910
      %1927 = vst [vmem:[%s575 + $0x8] sm:$0xff] %v1911
      %1928 = vst [vmem:[%s575 + $0x10] sm:$0xff] %v1912
      %1929 = vst [vmem:[%s575 + $0x18] sm:$0xff] %v1913
      %1930 = vst [vmem:[%s575 + $0x20] sm:$0xff] %v1914
      %1931 = vst [vmem:[%s575 + $0x28] sm:$0xff] %v1915
      %1932 = vst [vmem:[%s575 + $0x30] sm:$0xff] %v1916
      %1933 = vst [vmem:[%s575 + $0x38] sm:$0xff] %v1917
      %1934 = vst [vmem:[%s575 + $0x40] sm:$0xff] %v1918
      %1935 = vst [vmem:[%s575 + $0x48] sm:$0xff] %v1919
      %1936 = vst [vmem:[%s575 + $0x50] sm:$0xff] %v1920
      %1937 = vst [vmem:[%s575 + $0x58] sm:$0xff] %v1921
      %1938 = vst [vmem:[%s575 + $0x60] sm:$0xff] %v1922
      %1939 = vst [vmem:[%s575 + $0x68] sm:$0xff] %v1923
      %1940 = vst [vmem:[%s575 + $0x70] sm:$0xff] %v1924
      %1941 = vst [vmem:[%s575 + $0x78] sm:$0xff] %v1925
      %p1942 = scmp.lt.s32.totalorder %s29, 1
      %s1943 = scalar_select %p1942, %s29, 1
      %s1944 = smul.addr %s1943, 16
      %s1945 = smul.addr %s1944, 8
      %s1946 = scalar_lea.vmem %s18, %s1945
      // Predicated region
      $region93: #{_lambda_.1} parent=91 // pred_check
        %p1947 = pneg %p430
      $region94: #{_lambda_.1} parent=91 // pred_check_branch
        %1949 = sbr.rel (%p1947) target = $region96
      $region95: #{_lambda_.1} parent=91 // pred_region
        _
      $region96: #{_lambda_.1} parent=91 // pred_fallthru
        _
    $region92: #{_lambda_.1} parent=5 // pred_fallthru
      _
    %p1950 = scmp.le.s32.totalorder 2, %s24
    // Predicated region
    $region97: #{_lambda_.1} parent=5 // pred_check
      %p1951 = pneg %p1950
    $region98: #{_lambda_.1} parent=5 // pred_check_branch
      %1953 = sbr.rel (%p1951) target = $region100
    $region99: #{_lambda_.1} parent=5 // pred_region
      %s1954 = ssub.s32 %s24, 2
      // Predicated region
      $region101: #{_lambda_.1} parent=99 // pred_check
        %p1955 = pneg %p436
      $region102: #{_lambda_.1} parent=99 // pred_check_branch
        %1957 = sbr.rel (%p1955) target = $region104
      $region103: #{_lambda_.1} parent=99 // pred_region
        %p1958 = scmp.lt.s32.totalorder %s30, 1
        %s1959 = scalar_select %p1958, %s30, 1
        %s1960 = smul.addr %s1959, 16
        %s1961 = smul.addr %s1960, 8
        %s1962 = scalar_lea.vmem %s18, %s1961
      $region104: #{_lambda_.1} parent=99 // pred_fallthru
        _
    $region100: #{_lambda_.1} parent=5 // pred_fallthru
      _
  $region6: #{_lambda_.1} parent=0 // loop_footer
    %s28 = sadd.s32 1, %s24
  $region7: #{_lambda_.1} parent=0 // loop_footer_branch
    %23 = sbr.rel target = $region3
  $region8: #{_lambda_.1} parent=0 // loop_exit
    _

</llo_original>
